<compile_context>
chip_gen: v7x
topology: tpu7x:2x2x1
jax: 0.10.0
libtpu: 0.0.40
codegen_flags: <defaults>
</compile_context>

<pallas_src>
import math
from functools import partial

import jax
import jax.numpy as jnp
import numpy as np
from jax.experimental import pallas as pl
from jax.experimental.pallas import tpu as pltpu


# ----------------------------------------------------------------------------
# RoPE tables (faithful reimplementation of make_axial_pos / make_axial_pos_final
# and the SelfAttention.__init__ cos/sin buffers) — pure numpy glue.
# ----------------------------------------------------------------------------
def _make_axial_pos(h, w):
    h_pos = np.linspace(-1.0, 1.0, h + 1, dtype=np.float64)
    w_pos = np.linspace(-1.0, 1.0, w + 1, dtype=np.float64)
    h_pos = (h_pos[:-1] + h_pos[1:]) / 2
    w_pos = (w_pos[:-1] + w_pos[1:]) / 2
    hh, ww = np.meshgrid(h_pos, w_pos, indexing="ij")
    return np.stack([hh, ww], axis=-1).reshape(h * w, 2)


def _make_axial_pos_final(h, w, d):
    poses = []
    for i in range(d):
        pos_ax = _make_axial_pos(h // 2 ** i, w // 2 ** i)
        pos_rest = np.full((pos_ax.shape[0], 1), (d - i) / d)
        poses.insert(0, np.concatenate((pos_ax, pos_rest), axis=-1))
    return np.concatenate(poses, axis=-2)


def make_rope_tables(head_dim):
    log_min = math.log(math.pi)
    log_max = math.log(10 * math.pi)
    freqs = np.exp(np.linspace(log_min, log_max, head_dim // 8))
    pos = _make_axial_pos_final(32, 32, 6)
    pos = np.repeat(pos, 3, axis=0)
    pos = np.concatenate((np.zeros((1, 3)), pos), axis=0)
    theta_h = pos[:, 0:1] * freqs
    theta_w = pos[:, 1:2] * freqs
    theta_d = pos[:, 2:3] * freqs
    theta = np.concatenate((theta_h, theta_w, theta_d), axis=-1)  # (L, 3*head_dim//8)
    return np.cos(theta).astype(np.float32), np.sin(theta).astype(np.float32)


# ----------------------------------------------------------------------------
# Fused Block kernel: one grid step == Bt batch elements (full sequence).
# ----------------------------------------------------------------------------
def _block_kernel(x_ref, ln1_g_ref, ln1_b_ref, wq_ref, wk_ref, wv_ref, wout_ref,
                  cos_ref, sin_ref, perm_ref, ln2_g_ref, ln2_b_ref,
                  wup_a_ref, wup_g_ref, wdown_ref, o_ref,
                  k_scr, v_scr, o_scr,
                  *, n_heads, head_dim, kv_tile, q_tile, ff_tile):
    f32 = jnp.float32
    bf16 = jnp.bfloat16
    eps = 1e-5

    bt, seq, d = x_ref.shape
    rows = bt * seq

    x = x_ref[...].reshape(rows, d)                 # (R, D) f32 residual stream

    # ---------- LN1 -> fused q/k/v projections (lane-dense N=D, bf16 MXU) ----------
    mu = jnp.mean(x, axis=-1, keepdims=True)
    var = jnp.mean(jnp.square(x - mu), axis=-1, keepdims=True)
    h = (x - mu) * jax.lax.rsqrt(var + eps) * ln1_g_ref[...] + ln1_b_ref[...]
    hb = h.astype(bf16)

    q = jnp.dot(hb, wq_ref[...], preferred_element_type=f32)   # softmax scale folded in Wq
    k = jnp.dot(hb, wk_ref[...], preferred_element_type=f32)
    v = jnp.dot(hb, wv_ref[...], preferred_element_type=f32)

    # ---------- fused RoPE: block-diag (D,D) permutation + (S,D) tables ----------
    perm = perm_ref[...]                            # (D, D) bf16, exact 0/1 entries
    cos = cos_ref[...][None]                        # (1, S, D), broadcast over batch tile
    sin = sin_ref[...][None]
    qp = jnp.dot(q.astype(bf16), perm, preferred_element_type=f32)
    kp = jnp.dot(k.astype(bf16), perm, preferred_element_type=f32)
    q3 = (q.reshape(bt, seq, d) * cos + qp.reshape(bt, seq, d) * sin).astype(bf16)
    k3 = (k.reshape(bt, seq, d) * cos + kp.reshape(bt, seq, d) * sin).astype(bf16)

    # roped K and V live in lane-dense VMEM scratch so the kv loop can pl.ds them
    k_scr[...] = k3
    v_scr[...] = v.reshape(bt, seq, d).astype(bf16)

    # ---------- flash attention: q-tiles x heads, online softmax over kv tiles ----------
    n_qt = seq // q_tile
    for qi in range(n_qt):                          # static, small (<= S/256 at real sizes)
        q0 = qi * q_tile
        # causal: kv tiles strictly above the diagonal of this q tile are skipped
        n_kv_q = -(-(q0 + q_tile) // kv_tile)
        row_ids = q0 + jax.lax.broadcasted_iota(jnp.int32, (q_tile, 1), 0)
        col_ids = jax.lax.broadcasted_iota(jnp.int32, (1, kv_tile), 1)

        for hi in range(n_heads):                   # static unroll over heads
            lo = hi * head_dim
            q_h = q3[:, q0:q0 + q_tile, lo:lo + head_dim]   # (bt, qt, hd) bf16

            def kv_step(t, carry):
                m_i, l_i, acc = carry
                kv0 = t * kv_tile
                k_t = k_scr[:, pl.ds(kv0, kv_tile), lo:lo + head_dim]
                v_t = v_scr[:, pl.ds(kv0, kv_tile), lo:lo + head_dim]
                s = jnp.einsum("bqd,bkd->bqk", q_h, k_t,
                               preferred_element_type=f32)       # (bt, qt, kt)
                bias = jnp.where(row_ids >= col_ids + kv0, 0.0, -1e30).astype(f32)
                s = s + bias[None]
                m_new = jnp.maximum(m_i, jnp.max(s, axis=-1, keepdims=True))
                alpha = jnp.exp(m_i - m_new)
                p = jnp.exp(s - m_new)               # masked entries underflow to 0
                l_new = alpha * l_i + jnp.sum(p, axis=-1, keepdims=True)
                acc_new = alpha * acc + jnp.einsum("bqk,bkd->bqd", p.astype(bf16), v_t,
                                                   preferred_element_type=f32)
                return m_new, l_new, acc_new

            init = (jnp.full((bt, q_tile, 1), -1e30, f32),
                    jnp.zeros((bt, q_tile, 1), f32),
                    jnp.zeros((bt, q_tile, head_dim), f32))
            if n_kv_q == 1:
                m_i, l_i, acc = kv_step(0, init)     # static single-tile fast path
            else:
                m_i, l_i, acc = jax.lax.fori_loop(0, n_kv_q, kv_step, init)

            # deferred softmax normalization (EUP reciprocal, never sees l_i == 0
            # because causal prefill guarantees >=1 valid key per row)
            o_h = acc * pl.reciprocal(l_i, approx=True)
            o_scr[:, q0:q0 + q_tile, lo:lo + head_dim] = o_h.astype(bf16)

    # ---------- single fused out-projection (R,D)@(D,D) + residual ----------
    attn = jnp.dot(o_scr[...].reshape(rows, d), wout_ref[...],
                   preferred_element_type=f32)
    xa3 = (x + attn).reshape(bt, seq, d)

    # ---------- feed-forward, tiled over seq row-chunks ----------
    ln2_g = ln2_g_ref[...]
    ln2_b = ln2_b_ref[...]
    wup_a = wup_a_ref[...]
    wup_g = wup_g_ref[...]
    wdown = wdown_ref[...]
    for ci in range(seq // ff_tile):
        s0 = ci * ff_tile
        xc = xa3[:, s0:s0 + ff_tile, :].reshape(bt * ff_tile, d)
        mu2 = jnp.mean(xc, axis=-1, keepdims=True)
        var2 = jnp.mean(jnp.square(xc - mu2), axis=-1, keepdims=True)
        h2 = (xc - mu2) * jax.lax.rsqrt(var2 + eps) * ln2_g + ln2_b
        h2b = h2.astype(bf16)
        a = jnp.dot(h2b, wup_a, preferred_element_type=f32)   # (chunk, hidden)
        g = jnp.dot(h2b, wup_g, preferred_element_type=f32)
        sw = a * (g * jax.nn.sigmoid(g))                      # swiglu, f32
        y = xc + jnp.dot(sw.astype(bf16), wdown, preferred_element_type=f32)
        o_ref[:, s0:s0 + ff_tile, :] = y.reshape(bt, ff_tile, d)


# ----------------------------------------------------------------------------
# Wrapper: weight / RoPE-table preparation + pallas_call.
# ----------------------------------------------------------------------------
def _prepare_rope(cos, sin, head_dim, n_heads):
    """(S, D) head-tiled cos/sin tables (signs baked in) + block-diag swap perm."""
    cos = np.asarray(cos, np.float32)
    sin = np.asarray(sin, np.float32)
    s_len, r = cos.shape
    pad = head_dim - 2 * r
    c_head = np.concatenate([cos, cos, np.ones((s_len, pad), np.float32)], axis=1)
    s_head = np.concatenate([-sin, sin, np.zeros((s_len, pad), np.float32)], axis=1)
    c_tab = np.tile(c_head, (1, n_heads))           # (S, D) — NOT tiled over batch
    s_tab = np.tile(s_head, (1, n_heads))
    perm_h = np.zeros((head_dim, head_dim), np.float32)
    idx = np.arange(r)
    perm_h[idx + r, idx] = 1.0          # out col j < r        takes input col j+r
    perm_h[idx, idx + r] = 1.0          # out col r <= j < 2r  takes input col j-r
    diag = np.arange(2 * r, head_dim)
    perm_h[diag, diag] = 1.0            # pass-through cols (value unused: sin is 0 there)
    d = head_dim * n_heads
    perm = np.zeros((d, d), np.float32)
    for hi in range(n_heads):
        lo = hi * head_dim
        perm[lo:lo + head_dim, lo:lo + head_dim] = perm_h
    return jnp.asarray(c_tab), jnp.asarray(s_tab), jnp.asarray(perm, dtype=jnp.bfloat16)


def _derive_vmem_limit():
    """Per-generation VMEM budget (≈48 MiB on v7x, ≈96 MiB on v5e/v6e)."""
    try:
        cap = int(pltpu.get_tpu_info().vmem_capacity_bytes)
        return int(min(cap * 3 // 4, 100 * 1024 * 1024))
    except Exception:
        return 64 * 1024 * 1024


def block_forward(x, params, cos, sin, *, n_heads, head_dim, hidden_dim,
                  kv_tile=None, q_tile=None, ff_tile=None, batch_tile=None):
    B, S, D = x.shape
    assert D == n_heads * head_dim

    # batch-tile heuristic: fill the MXU M dim, but keep >=2 parallel grid steps
    # when B >= 2 so both v7x TensorCores get work.
    if batch_tile is None:
        batch_tile = max(1, min(B, pl.cdiv(256, max(S, 1))))
        if B >= 2:
            batch_tile = min(batch_tile, B // 2)
        batch_tile = max(batch_tile, 1)
        while B % batch_tile:
            batch_tile -= 1
    Bt = batch_tile
    if kv_tile is None:
        kv_tile = min(S, 512)
    if q_tile is None:
        q_tile = min(S, 256)
    if ff_tile is None:
        ff_tile = min(S, 512)
    assert B % Bt == 0 and S % kv_tile == 0 and S % q_tile == 0 and S % ff_tile == 0

    scale = 1.0 / math.sqrt(head_dim)
    bf16 = jnp.bfloat16
    wqkv = params["wqkv"]
    wq = (wqkv[:, 0 * D:1 * D] * scale).astype(bf16)   # attention scale folded into Wq
    wk = wqkv[:, 1 * D:2 * D].astype(bf16)
    wv = wqkv[:, 2 * D:3 * D].astype(bf16)
    wout = params["wout"].astype(bf16)
    wup_a = params["wup"][:, :hidden_dim].astype(bf16)
    wup_g = params["wup"][:, hidden_dim:].astype(bf16)
    wdown = params["wdown"].astype(bf16)

    c_tab, s_tab, perm = _prepare_rope(cos, sin, head_dim, n_heads)

    kernel = partial(_block_kernel, n_heads=n_heads, head_dim=head_dim,
                     kv_tile=kv_tile, q_tile=q_tile, ff_tile=ff_tile)

    def full_spec(arr):
        nd = arr.ndim
        return pl.BlockSpec(arr.shape, lambda b, _nd=nd: (0,) * _nd)

    steps = B // Bt
    R = B * S
    flops = (2 * R * D * 3 * D                    # fused q/k/v projections
             + 2 * 2 * R * D * D                  # fused rope permutation (q, k)
             + 2 * 2 * R * (S // 2 + kv_tile) * D # causal QK^T + PV (approx)
             + 2 * R * D * D                      # fused out projection
             + 2 * R * D * 2 * hidden_dim         # up (value + gate)
             + 2 * R * hidden_dim * D)            # down
    transcendentals = R * (S // 2) * n_heads + R * hidden_dim
    bytes_accessed = (2 * R * D * 4
                      + steps * 2 * (4 * D * D + 3 * D * hidden_dim + 2 * S * D * 4))
    cost = pl.CostEstimate(flops=int(flops), transcendentals=int(transcendentals),
                           bytes_accessed=int(bytes_accessed))

    # TODO(synk): weight specs are still default double-buffered; on a tight v7x
    # budget they could be kept in HBM (pl.ANY) and DMA'd once into run_scoped VMEM.
    return pl.pallas_call(
        kernel,
        out_shape=jax.ShapeDtypeStruct((B, S, D), jnp.float32),
        grid=(steps,),
        in_specs=[
            pl.BlockSpec((Bt, S, D), lambda b: (b, 0, 0)),   # x
            full_spec(params["ln1_g"]), full_spec(params["ln1_b"]),
            full_spec(wq), full_spec(wk), full_spec(wv), full_spec(wout),
            full_spec(c_tab), full_spec(s_tab), full_spec(perm),
            full_spec(params["ln2_g"]), full_spec(params["ln2_b"]),
            full_spec(wup_a), full_spec(wup_g), full_spec(wdown),
        ],
        out_specs=pl.BlockSpec((Bt, S, D), lambda b: (b, 0, 0)),
        scratch_shapes=[pltpu.VMEM((Bt, S, D), jnp.bfloat16),   # roped K
                        pltpu.VMEM((Bt, S, D), jnp.bfloat16),   # V
                        pltpu.VMEM((Bt, S, D), jnp.bfloat16)],  # per-head attn outputs
        compiler_params=pltpu.CompilerParams(
            dimension_semantics=("parallel",),
            vmem_limit_bytes=_derive_vmem_limit()),
        cost_estimate=cost,
    )(x, params["ln1_g"], params["ln1_b"], wq, wk, wv, wout,
      c_tab, s_tab, perm, params["ln2_g"], params["ln2_b"], wup_a, wup_g, wdown)


# ----------------------------------------------------------------------------
# Pure-JAX reference (straightforward formulation, same bf16 matmul inputs).
# ----------------------------------------------------------------------------
def _ref_single(xb, params, cos, sin, *, n_heads, head_dim, hidden_dim):
    f32, bf16 = jnp.float32, jnp.bfloat16
    eps = 1e-5
    d = n_heads * head_dim
    r = cos.shape[1]
    seq = xb.shape[0]
    scale = 1.0 / math.sqrt(head_dim)

    def ln(t, g, b):
        mu = jnp.mean(t, -1, keepdims=True)
        var = jnp.mean(jnp.square(t - mu), -1, keepdims=True)
        return (t - mu) * jax.lax.rsqrt(var + eps) * g + b

    h = ln(xb, params["ln1_g"][0], params["ln1_b"][0]).astype(bf16)
    qkv = jnp.dot(h, params["wqkv"].astype(bf16), preferred_element_type=f32)
    q, k, v = qkv[:, :d], qkv[:, d:2 * d], qkv[:, 2 * d:]

    def rope(t):
        t1, t2, tr = t[:, :r], t[:, r:2 * r], t[:, 2 * r:]
        return jnp.concatenate([t1 * cos - t2 * sin, t1 * sin + t2 * cos, tr], -1)

    causal = jnp.tril(jnp.ones((seq, seq), bool))
    outs = []
    for hi in range(n_heads):
        lo = hi * head_dim
        qh = rope(q[:, lo:lo + head_dim]).astype(bf16)
        kh = rope(k[:, lo:lo + head_dim]).astype(bf16)
        vh = v[:, lo:lo + head_dim].astype(bf16)
        s = jnp.dot(qh, kh.T, preferred_element_type=f32) * scale
        s = jnp.where(causal, s, -1e30)
        p = jax.nn.softmax(s, axis=-1)
        outs.append(jnp.dot(p.astype(bf16), vh, preferred_element_type=f32))
    xb = xb + jnp.dot(jnp.concatenate(outs, -1).astype(bf16),
                      params["wout"].astype(bf16), preferred_element_type=f32)

    h2 = ln(xb, params["ln2_g"][0], params["ln2_b"][0]).astype(bf16)
    u = jnp.dot(h2, params["wup"].astype(bf16), preferred_element_type=f32)
    a, g = u[:, :hidden_dim], u[:, hidden_dim:]
    sw = a * (g * jax.nn.sigmoid(g))
    return xb + jnp.dot(sw.astype(bf16), params["wdown"].astype(bf16),
                        preferred_element_type=f32)


if __name__ == "__main__":
    B, S = 2, 16
    dim, hidden_dim, head_dim = 64, 128, 32
    n_heads = dim // head_dim

    key = jax.random.PRNGKey(0)
    keys = jax.random.split(key, 5)
    # NOTE: the reference module zero-inits out_proj / down (zero_init), which would
    # make the block an identity. We use small deterministic random weights instead
    # so the kernel hot path is actually exercised; the math is identical.
    params = {
        "ln1_g": jnp.ones((1, dim), jnp.float32),
        "ln1_b": jnp.zeros((1, dim), jnp.float32),
        "wqkv": 0.05 * jax.random.normal(keys[0], (dim, 3 * dim), jnp.float32),
        "wout": 0.05 * jax.random.normal(keys[1], (dim, dim), jnp.float32),
        "ln2_g": jnp.ones((1, dim), jnp.float32),
        "ln2_b": jnp.zeros((1, dim), jnp.float32),
        "wup": 0.05 * jax.random.normal(keys[2], (dim, 2 * hidden_dim), jnp.float32),
        "wdown": 0.05 * jax.random.normal(keys[3], (hidden_dim, dim), jnp.float32),
    }
    x = jax.random.normal(keys[4], (B, S, dim), jnp.float32)

    cos_full, sin_full = make_rope_tables(head_dim)
    cos = jnp.asarray(cos_full[:S])   # (S, 3*head_dim//8)
    sin = jnp.asarray(sin_full[:S])

    ref = jax.vmap(lambda xb: _ref_single(
        xb, params, cos, sin,
        n_heads=n_heads, head_dim=head_dim, hidden_dim=hidden_dim))(x)
    ref = np.asarray(jax.block_until_ready(ref))

    # 1) default path: single q tile / single kv tile (static fast path)
    out = block_forward(x, params, cos, sin,
                        n_heads=n_heads, head_dim=head_dim, hidden_dim=hidden_dim)
    out = np.asarray(jax.block_until_ready(out))
    assert out.shape == (B, S, dim)
    np.testing.assert_allclose(out, ref, rtol=2e-2, atol=2e-2)

    # 2) exercise q-tiling, the fori_loop online-softmax kv path with causal
    #    kv skipping, and FFN row chunking (q_tile=kv_tile=ff_tile=8, S=16)
    out2 = block_forward(x, params, cos, sin, n_heads=n_heads, head_dim=head_dim,
                         hidden_dim=hidden_dim, kv_tile=8, q_tile=8, ff_tile=8)
    out2 = np.asarray(jax.block_until_ready(out2))
    np.testing.assert_allclose(out2, ref, rtol=2e-2, atol=2e-2)

    print("KERNEL_OK")

    # TODO(synk): the KV-cache incremental-decode path (cache is not None) is not
    # implemented; only the training/prefill path (cache=None) is covered.
</pallas_src>

<mosaic_0001>
module attributes {stable_mosaic.version = 11 : i64} {
  func.func @_block_kernel(%arg0: i32, %arg1: memref<1x16x64xf32, #tpu.memory_space<vmem>>, %arg2: memref<1x64xf32, #tpu.memory_space<vmem>>, %arg3: memref<1x64xf32, #tpu.memory_space<vmem>>, %arg4: memref<64x64xbf16, #tpu.memory_space<vmem>>, %arg5: memref<64x64xbf16, #tpu.memory_space<vmem>>, %arg6: memref<64x64xbf16, #tpu.memory_space<vmem>>, %arg7: memref<64x64xbf16, #tpu.memory_space<vmem>>, %arg8: memref<16x64xf32, #tpu.memory_space<vmem>>, %arg9: memref<16x64xf32, #tpu.memory_space<vmem>>, %arg10: memref<64x64xbf16, #tpu.memory_space<vmem>>, %arg11: memref<1x64xf32, #tpu.memory_space<vmem>>, %arg12: memref<1x64xf32, #tpu.memory_space<vmem>>, %arg13: memref<64x128xbf16, #tpu.memory_space<vmem>>, %arg14: memref<64x128xbf16, #tpu.memory_space<vmem>>, %arg15: memref<128x64xbf16, #tpu.memory_space<vmem>>, %arg16: memref<1x16x64xf32, #tpu.memory_space<vmem>>, %arg17: memref<1x16x64xbf16, #tpu.memory_space<vmem>>, %arg18: memref<1x16x64xbf16, #tpu.memory_space<vmem>>, %arg19: memref<1x16x64xbf16, #tpu.memory_space<vmem>>) attributes {dimension_semantics = [#tpu.dimension_semantics<parallel>], iteration_bounds = array<i64: 2>, scalar_prefetch = 0 : i64, scratch_operands = 3 : i64, tpu.core_type = #tpu.core_type<tc>, window_params = [{transform_indices = @transform_0, window_bounds = array<i64: 1, 16, 64>}, {pipeline_mode = #tpu.pipeline_mode<synchronous>, transform_indices = @transform_1, window_bounds = array<i64: 1, 64>}, {pipeline_mode = #tpu.pipeline_mode<synchronous>, transform_indices = @transform_2, window_bounds = array<i64: 1, 64>}, {pipeline_mode = #tpu.pipeline_mode<synchronous>, transform_indices = @transform_3, window_bounds = array<i64: 64, 64>}, {pipeline_mode = #tpu.pipeline_mode<synchronous>, transform_indices = @transform_4, window_bounds = array<i64: 64, 64>}, {pipeline_mode = #tpu.pipeline_mode<synchronous>, transform_indices = @transform_5, window_bounds = array<i64: 64, 64>}, {pipeline_mode = #tpu.pipeline_mode<synchronous>, transform_indices = @transform_6, window_bounds = array<i64: 64, 64>}, {pipeline_mode = #tpu.pipeline_mode<synchronous>, transform_indices = @transform_7, window_bounds = array<i64: 16, 64>}, {pipeline_mode = #tpu.pipeline_mode<synchronous>, transform_indices = @transform_8, window_bounds = array<i64: 16, 64>}, {pipeline_mode = #tpu.pipeline_mode<synchronous>, transform_indices = @transform_9, window_bounds = array<i64: 64, 64>}, {pipeline_mode = #tpu.pipeline_mode<synchronous>, transform_indices = @transform_10, window_bounds = array<i64: 1, 64>}, {pipeline_mode = #tpu.pipeline_mode<synchronous>, transform_indices = @transform_11, window_bounds = array<i64: 1, 64>}, {pipeline_mode = #tpu.pipeline_mode<synchronous>, transform_indices = @transform_12, window_bounds = array<i64: 64, 128>}, {pipeline_mode = #tpu.pipeline_mode<synchronous>, transform_indices = @transform_13, window_bounds = array<i64: 64, 128>}, {pipeline_mode = #tpu.pipeline_mode<synchronous>, transform_indices = @transform_14, window_bounds = array<i64: 128, 64>}, {transform_indices = @transform_15, window_bounds = array<i64: 1, 16, 64>}]} {
    %c0 = arith.constant 0 : index
    %c0_0 = arith.constant 0 : index
    %c0_1 = arith.constant 0 : index
    %0 = vector.load %arg1[%c0, %c0_0, %c0_1] : memref<1x16x64xf32, #tpu.memory_space<vmem>>, vector<1x16x64xf32>
    %1 = vector.shape_cast %0 : vector<1x16x64xf32> to vector<16x64xf32>
    %cst = arith.constant dense<0.000000e+00> : vector<16xf32>
    %2 = vector.multi_reduction <add>, %1, %cst [1] : vector<16x64xf32> to vector<16xf32>
    %3 = vector.shape_cast %2 : vector<16xf32> to vector<16x1xf32>
    %cst_2 = arith.constant 6.400000e+01 : f32
    %4 = vector.broadcast %cst_2 : f32 to vector<16x1xf32>
    %5 = arith.divf %3, %4 : vector<16x1xf32>
    %6 = vector.broadcast %5 : vector<16x1xf32> to vector<16x64xf32>
    %7 = arith.subf %1, %6 : vector<16x64xf32>
    %8 = arith.mulf %7, %7 : vector<16x64xf32>
    %cst_3 = arith.constant dense<0.000000e+00> : vector<16xf32>
    %9 = vector.multi_reduction <add>, %8, %cst_3 [1] : vector<16x64xf32> to vector<16xf32>
    %10 = vector.shape_cast %9 : vector<16xf32> to vector<16x1xf32>
    %cst_4 = arith.constant 6.400000e+01 : f32
    %11 = vector.broadcast %cst_4 : f32 to vector<16x1xf32>
    %12 = arith.divf %10, %11 : vector<16x1xf32>
    %13 = vector.broadcast %5 : vector<16x1xf32> to vector<16x64xf32>
    %14 = arith.subf %1, %13 : vector<16x64xf32>
    %cst_5 = arith.constant 9.99999974E-6 : f32
    %15 = vector.broadcast %cst_5 : f32 to vector<16x1xf32>
    %16 = arith.addf %12, %15 : vector<16x1xf32>
    %17 = math.rsqrt %16 : vector<16x1xf32>
    %18 = vector.broadcast %17 : vector<16x1xf32> to vector<16x64xf32>
    %19 = arith.mulf %14, %18 : vector<16x64xf32>
    %c0_6 = arith.constant 0 : index
    %c0_7 = arith.constant 0 : index
    %20 = vector.load %arg2[%c0_6, %c0_7] : memref<1x64xf32, #tpu.memory_space<vmem>>, vector<1x64xf32>
    %21 = vector.broadcast %20 : vector<1x64xf32> to vector<16x64xf32>
    %22 = arith.mulf %19, %21 : vector<16x64xf32>
    %c0_8 = arith.constant 0 : index
    %c0_9 = arith.constant 0 : index
    %23 = vector.load %arg3[%c0_8, %c0_9] : memref<1x64xf32, #tpu.memory_space<vmem>>, vector<1x64xf32>
    %24 = vector.broadcast %23 : vector<1x64xf32> to vector<16x64xf32>
    %25 = arith.addf %22, %24 : vector<16x64xf32>
    %26 = arith.truncf %25 : vector<16x64xf32> to vector<16x64xbf16>
    %c0_10 = arith.constant 0 : index
    %c0_11 = arith.constant 0 : index
    %27 = vector.load %arg4[%c0_10, %c0_11] : memref<64x64xbf16, #tpu.memory_space<vmem>>, vector<64x64xbf16>
    %cst_12 = arith.constant dense<0.000000e+00> : vector<16x64xf32>
    %28 = tpu.matmul %26, %27, %cst_12 {dimension_numbers = #tpu.dot_dimension_numbers<[1], [0], [0], [1], [0, 0, 1, 1], [], []>} : vector<16x64xbf16>, vector<64x64xbf16>, vector<16x64xf32> -> vector<16x64xf32>
    %c0_13 = arith.constant 0 : index
    %c0_14 = arith.constant 0 : index
    %29 = vector.load %arg5[%c0_13, %c0_14] : memref<64x64xbf16, #tpu.memory_space<vmem>>, vector<64x64xbf16>
    %cst_15 = arith.constant dense<0.000000e+00> : vector<16x64xf32>
    %30 = tpu.matmul %26, %29, %cst_15 {dimension_numbers = #tpu.dot_dimension_numbers<[1], [0], [0], [1], [0, 0, 1, 1], [], []>} : vector<16x64xbf16>, vector<64x64xbf16>, vector<16x64xf32> -> vector<16x64xf32>
    %c0_16 = arith.constant 0 : index
    %c0_17 = arith.constant 0 : index
    %31 = vector.load %arg6[%c0_16, %c0_17] : memref<64x64xbf16, #tpu.memory_space<vmem>>, vector<64x64xbf16>
    %cst_18 = arith.constant dense<0.000000e+00> : vector<16x64xf32>
    %32 = tpu.matmul %26, %31, %cst_18 {dimension_numbers = #tpu.dot_dimension_numbers<[1], [0], [0], [1], [0, 0, 1, 1], [], []>} : vector<16x64xbf16>, vector<64x64xbf16>, vector<16x64xf32> -> vector<16x64xf32>
    %c0_19 = arith.constant 0 : index
    %c0_20 = arith.constant 0 : index
    %33 = vector.load %arg10[%c0_19, %c0_20] : memref<64x64xbf16, #tpu.memory_space<vmem>>, vector<64x64xbf16>
    %c0_21 = arith.constant 0 : index
    %c0_22 = arith.constant 0 : index
    %34 = vector.load %arg8[%c0_21, %c0_22] : memref<16x64xf32, #tpu.memory_space<vmem>>, vector<16x64xf32>
    %35 = vector.shape_cast %34 : vector<16x64xf32> to vector<1x16x64xf32>
    %c0_23 = arith.constant 0 : index
    %c0_24 = arith.constant 0 : index
    %36 = vector.load %arg9[%c0_23, %c0_24] : memref<16x64xf32, #tpu.memory_space<vmem>>, vector<16x64xf32>
    %37 = vector.shape_cast %36 : vector<16x64xf32> to vector<1x16x64xf32>
    %38 = arith.truncf %28 : vector<16x64xf32> to vector<16x64xbf16>
    %cst_25 = arith.constant dense<0.000000e+00> : vector<16x64xf32>
    %39 = tpu.matmul %38, %33, %cst_25 {dimension_numbers = #tpu.dot_dimension_numbers<[1], [0], [0], [1], [0, 0, 1, 1], [], []>} : vector<16x64xbf16>, vector<64x64xbf16>, vector<16x64xf32> -> vector<16x64xf32>
    %40 = arith.truncf %30 : vector<16x64xf32> to vector<16x64xbf16>
    %cst_26 = arith.constant dense<0.000000e+00> : vector<16x64xf32>
    %41 = tpu.matmul %40, %33, %cst_26 {dimension_numbers = #tpu.dot_dimension_numbers<[1], [0], [0], [1], [0, 0, 1, 1], [], []>} : vector<16x64xbf16>, vector<64x64xbf16>, vector<16x64xf32> -> vector<16x64xf32>
    %42 = vector.shape_cast %28 : vector<16x64xf32> to vector<1x16x64xf32>
    %43 = arith.mulf %42, %35 : vector<1x16x64xf32>
    %44 = vector.shape_cast %39 : vector<16x64xf32> to vector<1x16x64xf32>
    %45 = arith.mulf %44, %37 : vector<1x16x64xf32>
    %46 = arith.addf %43, %45 : vector<1x16x64xf32>
    %47 = arith.truncf %46 : vector<1x16x64xf32> to vector<1x16x64xbf16>
    %48 = vector.shape_cast %30 : vector<16x64xf32> to vector<1x16x64xf32>
    %49 = arith.mulf %48, %35 : vector<1x16x64xf32>
    %50 = vector.shape_cast %41 : vector<16x64xf32> to vector<1x16x64xf32>
    %51 = arith.mulf %50, %37 : vector<1x16x64xf32>
    %52 = arith.addf %49, %51 : vector<1x16x64xf32>
    %53 = arith.truncf %52 : vector<1x16x64xf32> to vector<1x16x64xbf16>
    %c0_27 = arith.constant 0 : index
    %c0_28 = arith.constant 0 : index
    %c0_29 = arith.constant 0 : index
    %54 = vector.load %arg17[%c0_27, %c0_28, %c0_29] : memref<1x16x64xbf16, #tpu.memory_space<vmem>>, vector<1x16x64xbf16>
    tpu.vector_store %arg17[%c0_27, %c0_28, %c0_29], %53 {strides = array<i32>} : memref<1x16x64xbf16, #tpu.memory_space<vmem>>, vector<1x16x64xbf16>,
    %55 = vector.shape_cast %32 : vector<16x64xf32> to vector<1x16x64xf32>
    %56 = arith.truncf %55 : vector<1x16x64xf32> to vector<1x16x64xbf16>
    %c0_30 = arith.constant 0 : index
    %c0_31 = arith.constant 0 : index
    %c0_32 = arith.constant 0 : index
    %57 = vector.load %arg18[%c0_30, %c0_31, %c0_32] : memref<1x16x64xbf16, #tpu.memory_space<vmem>>, vector<1x16x64xbf16>
    tpu.vector_store %arg18[%c0_30, %c0_31, %c0_32], %56 {strides = array<i32>} : memref<1x16x64xbf16, #tpu.memory_space<vmem>>, vector<1x16x64xbf16>,
    %58 = tpu.iota {dimensions = array<i32: 0>} : vector<16x1xi32>
    %c0_i32 = arith.constant 0 : i32
    %59 = vector.broadcast %c0_i32 : i32 to vector<16x1xi32>
    %60 = arith.addi %59, %58 : vector<16x1xi32>
    %61 = tpu.iota {dimensions = array<i32: 1>} : vector<1x16xi32>
    %62 = vector.extract_strided_slice %47 {offsets = [0, 0, 0], sizes = [1, 16, 32], strides = [1, 1, 1]} : vector<1x16x64xbf16> to vector<1x16x32xbf16>
    %cst_33 = arith.constant -1.000000e+30 : f32
    %63 = vector.broadcast %cst_33 : f32 to vector<1x16x1xf32>
    %cst_34 = arith.constant 0.000000e+00 : f32
    %64 = vector.broadcast %cst_34 : f32 to vector<1x16x1xf32>
    %cst_35 = arith.constant 0.000000e+00 : f32
    %65 = vector.broadcast %cst_35 : f32 to vector<1x16x32xf32>
    %c0_36 = arith.constant 0 : index
    %c0_37 = arith.constant 0 : index
    %c0_38 = arith.constant 0 : index
    %66 = vector.load %arg17[%c0_36, %c0_37, %c0_38] : memref<1x16x64xbf16, #tpu.memory_space<vmem>>, vector<1x16x32xbf16>
    %c0_39 = arith.constant 0 : index
    %c0_40 = arith.constant 0 : index
    %c0_41 = arith.constant 0 : index
    %67 = vector.load %arg18[%c0_39, %c0_40, %c0_41] : memref<1x16x64xbf16, #tpu.memory_space<vmem>>, vector<1x16x32xbf16>
    "tpu.trace_start"() <{level = 10 : i32, message = "bqd,bkd->bqk"}> : () -> ()
    %cst_42 = arith.constant dense<0.000000e+00> : vector<1x16x16xf32>
    %68 = tpu.matmul %62, %66, %cst_42 {dimension_numbers = #tpu.dot_dimension_numbers<[2], [2], [1], [1], [0, 0, 0, 1, 1, 1], [0], [0]>} : vector<1x16x32xbf16>, vector<1x16x32xbf16>, vector<1x16x16xf32> -> vector<1x16x16xf32>
    "tpu.trace_stop"() : () -> ()
    %c0_i32_43 = arith.constant 0 : i32
    %69 = vector.broadcast %c0_i32_43 : i32 to vector<1x16xi32>
    %70 = arith.addi %61, %69 : vector<1x16xi32>
    %71 = vector.broadcast %60 : vector<16x1xi32> to vector<16x16xi32>
    %72 = vector.broadcast %70 : vector<1x16xi32> to vector<16x16xi32>
    %73 = arith.cmpi sge, %71, %72 : vector<16x16xi32>
    %cst_44 = arith.constant 0.000000e+00 : f32
    %cst_45 = arith.constant -1.000000e+30 : f32
    %74 = vector.broadcast %cst_44 : f32 to vector<16x16xf32>
    %75 = vector.broadcast %cst_45 : f32 to vector<16x16xf32>
    %76 = arith.select %73, %74, %75 : vector<16x16xi1>, vector<16x16xf32>
    %77 = vector.shape_cast %76 : vector<16x16xf32> to vector<1x16x16xf32>
    %78 = arith.addf %68, %77 : vector<1x16x16xf32>
    %cst_46 = arith.constant dense<0xFF800000> : vector<1x16xf32>
    %79 = vector.multi_reduction <maximumf>, %78, %cst_46 [2] : vector<1x16x16xf32> to vector<1x16xf32>
    %80 = vector.shape_cast %79 : vector<1x16xf32> to vector<1x16x1xf32>
    %81 = arith.maximumf %63, %80 : vector<1x16x1xf32>
    %82 = arith.subf %63, %81 : vector<1x16x1xf32>
    %83 = math.exp %82 : vector<1x16x1xf32>
    %84 = vector.broadcast %81 : vector<1x16x1xf32> to vector<1x16x16xf32>
    %85 = arith.subf %78, %84 : vector<1x16x16xf32>
    %86 = math.exp %85 : vector<1x16x16xf32>
    %87 = arith.mulf %83, %64 : vector<1x16x1xf32>
    %cst_47 = arith.constant dense<0.000000e+00> : vector<1x16xf32>
    %88 = vector.multi_reduction <add>, %86, %cst_47 [2] : vector<1x16x16xf32> to vector<1x16xf32>
    %89 = vector.shape_cast %88 : vector<1x16xf32> to vector<1x16x1xf32>
    %90 = arith.addf %87, %89 : vector<1x16x1xf32>
    %91 = vector.broadcast %83 : vector<1x16x1xf32> to vector<1x16x32xf32>
    %92 = arith.mulf %91, %65 : vector<1x16x32xf32>
    %93 = arith.truncf %86 : vector<1x16x16xf32> to vector<1x16x16xbf16>
    "tpu.trace_start"() <{level = 10 : i32, message = "bqk,bkd->bqd"}> : () -> ()
    %cst_48 = arith.constant dense<0.000000e+00> : vector<1x16x32xf32>
    %94 = tpu.matmul %93, %67, %cst_48 {dimension_numbers = #tpu.dot_dimension_numbers<[2], [1], [1], [2], [0, 0, 0, 1, 1, 2], [0], [0]>} : vector<1x16x16xbf16>, vector<1x16x32xbf16>, vector<1x16x32xf32> -> vector<1x16x32xf32>
    "tpu.trace_stop"() : () -> ()
    %95 = arith.addf %92, %94 : vector<1x16x32xf32>
    %96 = tpu.reciprocal %90 {approx = true} : vector<1x16x1xf32> -> vector<1x16x1xf32>
    %97 = vector.broadcast %96 : vector<1x16x1xf32> to vector<1x16x32xf32>
    %98 = arith.mulf %95, %97 : vector<1x16x32xf32>
    %99 = arith.truncf %98 : vector<1x16x32xf32> to vector<1x16x32xbf16>
    %c0_49 = arith.constant 0 : index
    %c0_50 = arith.constant 0 : index
    %c0_51 = arith.constant 0 : index
    %100 = vector.load %arg19[%c0_49, %c0_50, %c0_51] : memref<1x16x64xbf16, #tpu.memory_space<vmem>>, vector<1x16x32xbf16>
    tpu.vector_store %arg19[%c0_49, %c0_50, %c0_51], %99 {strides = array<i32>} : memref<1x16x64xbf16, #tpu.memory_space<vmem>>, vector<1x16x32xbf16>,
    %101 = vector.extract_strided_slice %47 {offsets = [0, 0, 32], sizes = [1, 16, 32], strides = [1, 1, 1]} : vector<1x16x64xbf16> to vector<1x16x32xbf16>
    %cst_52 = arith.constant -1.000000e+30 : f32
    %102 = vector.broadcast %cst_52 : f32 to vector<1x16x1xf32>
    %cst_53 = arith.constant 0.000000e+00 : f32
    %103 = vector.broadcast %cst_53 : f32 to vector<1x16x1xf32>
    %cst_54 = arith.constant 0.000000e+00 : f32
    %104 = vector.broadcast %cst_54 : f32 to vector<1x16x32xf32>
    %c0_55 = arith.constant 0 : index
    %c0_56 = arith.constant 0 : index
    %c32 = arith.constant 32 : index
    %105 = vector.load %arg17[%c0_55, %c0_56, %c32] : memref<1x16x64xbf16, #tpu.memory_space<vmem>>, vector<1x16x32xbf16>
    %c0_57 = arith.constant 0 : index
    %c0_58 = arith.constant 0 : index
    %c32_59 = arith.constant 32 : index
    %106 = vector.load %arg18[%c0_57, %c0_58, %c32_59] : memref<1x16x64xbf16, #tpu.memory_space<vmem>>, vector<1x16x32xbf16>
    "tpu.trace_start"() <{level = 10 : i32, message = "bqd,bkd->bqk"}> : () -> ()
    %cst_60 = arith.constant dense<0.000000e+00> : vector<1x16x16xf32>
    %107 = tpu.matmul %101, %105, %cst_60 {dimension_numbers = #tpu.dot_dimension_numbers<[2], [2], [1], [1], [0, 0, 0, 1, 1, 1], [0], [0]>} : vector<1x16x32xbf16>, vector<1x16x32xbf16>, vector<1x16x16xf32> -> vector<1x16x16xf32>
    "tpu.trace_stop"() : () -> ()
    %c0_i32_61 = arith.constant 0 : i32
    %108 = vector.broadcast %c0_i32_61 : i32 to vector<1x16xi32>
    %109 = arith.addi %61, %108 : vector<1x16xi32>
    %110 = vector.broadcast %60 : vector<16x1xi32> to vector<16x16xi32>
    %111 = vector.broadcast %109 : vector<1x16xi32> to vector<16x16xi32>
    %112 = arith.cmpi sge, %110, %111 : vector<16x16xi32>
    %cst_62 = arith.constant 0.000000e+00 : f32
    %cst_63 = arith.constant -1.000000e+30 : f32
    %113 = vector.broadcast %cst_62 : f32 to vector<16x16xf32>
    %114 = vector.broadcast %cst_63 : f32 to vector<16x16xf32>
    %115 = arith.select %112, %113, %114 : vector<16x16xi1>, vector<16x16xf32>
    %116 = vector.shape_cast %115 : vector<16x16xf32> to vector<1x16x16xf32>
    %117 = arith.addf %107, %116 : vector<1x16x16xf32>
    %cst_64 = arith.constant dense<0xFF800000> : vector<1x16xf32>
    %118 = vector.multi_reduction <maximumf>, %117, %cst_64 [2] : vector<1x16x16xf32> to vector<1x16xf32>
    %119 = vector.shape_cast %118 : vector<1x16xf32> to vector<1x16x1xf32>
    %120 = arith.maximumf %102, %119 : vector<1x16x1xf32>
    %121 = arith.subf %102, %120 : vector<1x16x1xf32>
    %122 = math.exp %121 : vector<1x16x1xf32>
    %123 = vector.broadcast %120 : vector<1x16x1xf32> to vector<1x16x16xf32>
    %124 = arith.subf %117, %123 : vector<1x16x16xf32>
    %125 = math.exp %124 : vector<1x16x16xf32>
    %126 = arith.mulf %122, %103 : vector<1x16x1xf32>
    %cst_65 = arith.constant dense<0.000000e+00> : vector<1x16xf32>
    %127 = vector.multi_reduction <add>, %125, %cst_65 [2] : vector<1x16x16xf32> to vector<1x16xf32>
    %128 = vector.shape_cast %127 : vector<1x16xf32> to vector<1x16x1xf32>
    %129 = arith.addf %126, %128 : vector<1x16x1xf32>
    %130 = vector.broadcast %122 : vector<1x16x1xf32> to vector<1x16x32xf32>
    %131 = arith.mulf %130, %104 : vector<1x16x32xf32>
    %132 = arith.truncf %125 : vector<1x16x16xf32> to vector<1x16x16xbf16>
    "tpu.trace_start"() <{level = 10 : i32, message = "bqk,bkd->bqd"}> : () -> ()
    %cst_66 = arith.constant dense<0.000000e+00> : vector<1x16x32xf32>
    %133 = tpu.matmul %132, %106, %cst_66 {dimension_numbers = #tpu.dot_dimension_numbers<[2], [1], [1], [2], [0, 0, 0, 1, 1, 2], [0], [0]>} : vector<1x16x16xbf16>, vector<1x16x32xbf16>, vector<1x16x32xf32> -> vector<1x16x32xf32>
    "tpu.trace_stop"() : () -> ()
    %134 = arith.addf %131, %133 : vector<1x16x32xf32>
    %135 = tpu.reciprocal %129 {approx = true} : vector<1x16x1xf32> -> vector<1x16x1xf32>
    %136 = vector.broadcast %135 : vector<1x16x1xf32> to vector<1x16x32xf32>
    %137 = arith.mulf %134, %136 : vector<1x16x32xf32>
    %138 = arith.truncf %137 : vector<1x16x32xf32> to vector<1x16x32xbf16>
    %c0_67 = arith.constant 0 : index
    %c0_68 = arith.constant 0 : index
    %c32_69 = arith.constant 32 : index
    %139 = vector.load %arg19[%c0_67, %c0_68, %c32_69] : memref<1x16x64xbf16, #tpu.memory_space<vmem>>, vector<1x16x32xbf16>
    tpu.vector_store %arg19[%c0_67, %c0_68, %c32_69], %138 {strides = array<i32>} : memref<1x16x64xbf16, #tpu.memory_space<vmem>>, vector<1x16x32xbf16>,
    %c0_70 = arith.constant 0 : index
    %c0_71 = arith.constant 0 : index
    %c0_72 = arith.constant 0 : index
    %140 = vector.load %arg19[%c0_70, %c0_71, %c0_72] : memref<1x16x64xbf16, #tpu.memory_space<vmem>>, vector<1x16x64xbf16>
    %141 = vector.shape_cast %140 : vector<1x16x64xbf16> to vector<16x64xbf16>
    %c0_73 = arith.constant 0 : index
    %c0_74 = arith.constant 0 : index
    %142 = vector.load %arg7[%c0_73, %c0_74] : memref<64x64xbf16, #tpu.memory_space<vmem>>, vector<64x64xbf16>
    %cst_75 = arith.constant dense<0.000000e+00> : vector<16x64xf32>
    %143 = tpu.matmul %141, %142, %cst_75 {dimension_numbers = #tpu.dot_dimension_numbers<[1], [0], [0], [1], [0, 0, 1, 1], [], []>} : vector<16x64xbf16>, vector<64x64xbf16>, vector<16x64xf32> -> vector<16x64xf32>
    %144 = arith.addf %1, %143 : vector<16x64xf32>
    %145 = vector.shape_cast %144 : vector<16x64xf32> to vector<1x16x64xf32>
    %c0_76 = arith.constant 0 : index
    %c0_77 = arith.constant 0 : index
    %146 = vector.load %arg11[%c0_76, %c0_77] : memref<1x64xf32, #tpu.memory_space<vmem>>, vector<1x64xf32>
    %c0_78 = arith.constant 0 : index
    %c0_79 = arith.constant 0 : index
    %147 = vector.load %arg12[%c0_78, %c0_79] : memref<1x64xf32, #tpu.memory_space<vmem>>, vector<1x64xf32>
    %c0_80 = arith.constant 0 : index
    %c0_81 = arith.constant 0 : index
    %148 = vector.load %arg13[%c0_80, %c0_81] : memref<64x128xbf16, #tpu.memory_space<vmem>>, vector<64x128xbf16>
    %c0_82 = arith.constant 0 : index
    %c0_83 = arith.constant 0 : index
    %149 = vector.load %arg14[%c0_82, %c0_83] : memref<64x128xbf16, #tpu.memory_space<vmem>>, vector<64x128xbf16>
    %c0_84 = arith.constant 0 : index
    %c0_85 = arith.constant 0 : index
    %150 = vector.load %arg15[%c0_84, %c0_85] : memref<128x64xbf16, #tpu.memory_space<vmem>>, vector<128x64xbf16>
    %151 = vector.shape_cast %145 : vector<1x16x64xf32> to vector<16x64xf32>
    %cst_86 = arith.constant dense<0.000000e+00> : vector<16xf32>
    %152 = vector.multi_reduction <add>, %151, %cst_86 [1] : vector<16x64xf32> to vector<16xf32>
    %153 = vector.shape_cast %152 : vector<16xf32> to vector<16x1xf32>
    %cst_87 = arith.constant 6.400000e+01 : f32
    %154 = vector.broadcast %cst_87 : f32 to vector<16x1xf32>
    %155 = arith.divf %153, %154 : vector<16x1xf32>
    %156 = vector.broadcast %155 : vector<16x1xf32> to vector<16x64xf32>
    %157 = arith.subf %151, %156 : vector<16x64xf32>
    %158 = arith.mulf %157, %157 : vector<16x64xf32>
    %cst_88 = arith.constant dense<0.000000e+00> : vector<16xf32>
    %159 = vector.multi_reduction <add>, %158, %cst_88 [1] : vector<16x64xf32> to vector<16xf32>
    %160 = vector.shape_cast %159 : vector<16xf32> to vector<16x1xf32>
    %cst_89 = arith.constant 6.400000e+01 : f32
    %161 = vector.broadcast %cst_89 : f32 to vector<16x1xf32>
    %162 = arith.divf %160, %161 : vector<16x1xf32>
    %163 = vector.broadcast %155 : vector<16x1xf32> to vector<16x64xf32>
    %164 = arith.subf %151, %163 : vector<16x64xf32>
    %cst_90 = arith.constant 9.99999974E-6 : f32
    %165 = vector.broadcast %cst_90 : f32 to vector<16x1xf32>
    %166 = arith.addf %162, %165 : vector<16x1xf32>
    %167 = math.rsqrt %166 : vector<16x1xf32>
    %168 = vector.broadcast %167 : vector<16x1xf32> to vector<16x64xf32>
    %169 = arith.mulf %164, %168 : vector<16x64xf32>
    %170 = vector.broadcast %146 : vector<1x64xf32> to vector<16x64xf32>
    %171 = arith.mulf %169, %170 : vector<16x64xf32>
    %172 = vector.broadcast %147 : vector<1x64xf32> to vector<16x64xf32>
    %173 = arith.addf %171, %172 : vector<16x64xf32>
    %174 = arith.truncf %173 : vector<16x64xf32> to vector<16x64xbf16>
    %cst_91 = arith.constant dense<0.000000e+00> : vector<16x128xf32>
    %175 = tpu.matmul %174, %148, %cst_91 {dimension_numbers = #tpu.dot_dimension_numbers<[1], [0], [0], [1], [0, 0, 1, 1], [], []>} : vector<16x64xbf16>, vector<64x128xbf16>, vector<16x128xf32> -> vector<16x128xf32>
    %cst_92 = arith.constant dense<0.000000e+00> : vector<16x128xf32>
    %176 = tpu.matmul %174, %149, %cst_92 {dimension_numbers = #tpu.dot_dimension_numbers<[1], [0], [0], [1], [0, 0, 1, 1], [], []>} : vector<16x64xbf16>, vector<64x128xbf16>, vector<16x128xf32> -> vector<16x128xf32>
    %177 = arith.negf %176 : vector<16x128xf32>
    %178 = math.exp %177 : vector<16x128xf32>
    %cst_93 = arith.constant 1.000000e+00 : f32
    %179 = vector.broadcast %cst_93 : f32 to vector<16x128xf32>
    %180 = arith.addf %179, %178 : vector<16x128xf32>
    %181 = arith.divf %179, %180 : vector<16x128xf32>
    %182 = arith.mulf %176, %181 : vector<16x128xf32>
    %183 = arith.mulf %175, %182 : vector<16x128xf32>
    %184 = arith.truncf %183 : vector<16x128xf32> to vector<16x128xbf16>
    %cst_94 = arith.constant dense<0.000000e+00> : vector<16x64xf32>
    %185 = tpu.matmul %184, %150, %cst_94 {dimension_numbers = #tpu.dot_dimension_numbers<[1], [0], [0], [1], [0, 0, 1, 1], [], []>} : vector<16x128xbf16>, vector<128x64xbf16>, vector<16x64xf32> -> vector<16x64xf32>
    %186 = arith.addf %151, %185 : vector<16x64xf32>
    %187 = vector.shape_cast %186 : vector<16x64xf32> to vector<1x16x64xf32>
    %c0_95 = arith.constant 0 : index
    %c0_96 = arith.constant 0 : index
    %c0_97 = arith.constant 0 : index
    %188 = vector.load %arg16[%c0_95, %c0_96, %c0_97] : memref<1x16x64xf32, #tpu.memory_space<vmem>>, vector<1x16x64xf32>
    tpu.vector_store %arg16[%c0_95, %c0_96, %c0_97], %187 {strides = array<i32>} : memref<1x16x64xf32, #tpu.memory_space<vmem>>, vector<1x16x64xf32>,
    return
  }
  func.func @transform_0(%arg0: i32) -> (i32, i32, i32) {
    %c0_i32 = arith.constant 0 : i32
    %c0_i32_0 = arith.constant 0 : i32
    %c0_i32_1 = arith.constant 0 : i32
    return %arg0, %c0_i32, %c0_i32_0 : i32, i32, i32
  }
  func.func @transform_1(%arg0: i32) -> (i32, i32) {
    %c0_i32 = arith.constant 0 : i32
    %c0_i32_0 = arith.constant 0 : i32
    %c0_i32_1 = arith.constant 0 : i32
    return %c0_i32, %c0_i32_0 : i32, i32
  }
  func.func @transform_2(%arg0: i32) -> (i32, i32) {
    %c0_i32 = arith.constant 0 : i32
    %c0_i32_0 = arith.constant 0 : i32
    %c0_i32_1 = arith.constant 0 : i32
    return %c0_i32, %c0_i32_0 : i32, i32
  }
  func.func @transform_3(%arg0: i32) -> (i32, i32) {
    %c0_i32 = arith.constant 0 : i32
    %c0_i32_0 = arith.constant 0 : i32
    %c0_i32_1 = arith.constant 0 : i32
    return %c0_i32, %c0_i32_0 : i32, i32
  }
  func.func @transform_4(%arg0: i32) -> (i32, i32) {
    %c0_i32 = arith.constant 0 : i32
    %c0_i32_0 = arith.constant 0 : i32
    %c0_i32_1 = arith.constant 0 : i32
    return %c0_i32, %c0_i32_0 : i32, i32
  }
  func.func @transform_5(%arg0: i32) -> (i32, i32) {
    %c0_i32 = arith.constant 0 : i32
    %c0_i32_0 = arith.constant 0 : i32
    %c0_i32_1 = arith.constant 0 : i32
    return %c0_i32, %c0_i32_0 : i32, i32
  }
  func.func @transform_6(%arg0: i32) -> (i32, i32) {
    %c0_i32 = arith.constant 0 : i32
    %c0_i32_0 = arith.constant 0 : i32
    %c0_i32_1 = arith.constant 0 : i32
    return %c0_i32, %c0_i32_0 : i32, i32
  }
  func.func @transform_7(%arg0: i32) -> (i32, i32) {
    %c0_i32 = arith.constant 0 : i32
    %c0_i32_0 = arith.constant 0 : i32
    %c0_i32_1 = arith.constant 0 : i32
    return %c0_i32, %c0_i32_0 : i32, i32
  }
  func.func @transform_8(%arg0: i32) -> (i32, i32) {
    %c0_i32 = arith.constant 0 : i32
    %c0_i32_0 = arith.constant 0 : i32
    %c0_i32_1 = arith.constant 0 : i32
    return %c0_i32, %c0_i32_0 : i32, i32
  }
  func.func @transform_9(%arg0: i32) -> (i32, i32) {
    %c0_i32 = arith.constant 0 : i32
    %c0_i32_0 = arith.constant 0 : i32
    %c0_i32_1 = arith.constant 0 : i32
    return %c0_i32, %c0_i32_0 : i32, i32
  }
  func.func @transform_10(%arg0: i32) -> (i32, i32) {
    %c0_i32 = arith.constant 0 : i32
    %c0_i32_0 = arith.constant 0 : i32
    %c0_i32_1 = arith.constant 0 : i32
    return %c0_i32, %c0_i32_0 : i32, i32
  }
  func.func @transform_11(%arg0: i32) -> (i32, i32) {
    %c0_i32 = arith.constant 0 : i32
    %c0_i32_0 = arith.constant 0 : i32
    %c0_i32_1 = arith.constant 0 : i32
    return %c0_i32, %c0_i32_0 : i32, i32
  }
  func.func @transform_12(%arg0: i32) -> (i32, i32) {
    %c0_i32 = arith.constant 0 : i32
    %c0_i32_0 = arith.constant 0 : i32
    %c0_i32_1 = arith.constant 0 : i32
    return %c0_i32, %c0_i32_0 : i32, i32
  }
  func.func @transform_13(%arg0: i32) -> (i32, i32) {
    %c0_i32 = arith.constant 0 : i32
    %c0_i32_0 = arith.constant 0 : i32
    %c0_i32_1 = arith.constant 0 : i32
    return %c0_i32, %c0_i32_0 : i32, i32
  }
  func.func @transform_14(%arg0: i32) -> (i32, i32) {
    %c0_i32 = arith.constant 0 : i32
    %c0_i32_0 = arith.constant 0 : i32
    %c0_i32_1 = arith.constant 0 : i32
    return %c0_i32, %c0_i32_0 : i32, i32
  }
  func.func @transform_15(%arg0: i32) -> (i32, i32, i32) {
    %c0_i32 = arith.constant 0 : i32
    %c0_i32_0 = arith.constant 0 : i32
    %c0_i32_1 = arith.constant 0 : i32
    return %arg0, %c0_i32, %c0_i32_0 : i32, i32, i32
  }
}

</mosaic_0001>

<llo_original>
// kernel: tpu_custom_call.1
$region0: #{tpu_custom_call.1}
  #allocation0 [shape = 'u32[]', space=smem, size = 0x4, offset = 0x4, fixed_abs, tag = 'smem constant byte address 0x4 - core index']
  #allocation1 [shape = 'u32[144,128]{1,0:T(1,128)}', space=vmem, size = 0x12000, scoped, tag = 'internal scratch']
  #allocation2 [shape = 'bf16[1,16,64]{2,1,0:T(16,128)(2,1)}', space=vmem, size = 0x1000, scoped, tag = 'scratch operand']
  #allocation3 [shape = 'bf16[1,16,64]{2,1,0:T(16,128)(2,1)}', space=vmem, size = 0x1000, scoped, tag = 'scratch operand']
  #allocation4 [shape = 'bf16[1,16,64]{2,1,0:T(16,128)(2,1)}', space=vmem, size = 0x1000, scoped, tag = 'scratch operand']
  %s0 = inlined_call_operand.hbm [shape: f32[2,16,64], index: 0, kind: input, shape index: {}]
  %s1 = inlined_call_operand.hbm [shape: f32[1,64], index: 1, kind: input, shape index: {}]
  %s2 = inlined_call_operand.hbm [shape: f32[1,64], index: 2, kind: input, shape index: {}]
  %s3 = inlined_call_operand.hbm [shape: bf16[64,64], index: 3, kind: input, shape index: {}]
  %s4 = inlined_call_operand.hbm [shape: bf16[64,64], index: 4, kind: input, shape index: {}]
  %s5 = inlined_call_operand.hbm [shape: bf16[64,64], index: 5, kind: input, shape index: {}]
  %s6 = inlined_call_operand.hbm [shape: bf16[64,64], index: 6, kind: input, shape index: {}]
  %s7 = inlined_call_operand.hbm [shape: f32[16,64], index: 7, kind: input, shape index: {}]
  %s8 = inlined_call_operand.hbm [shape: f32[16,64], index: 8, kind: input, shape index: {}]
  %s9 = inlined_call_operand.hbm [shape: bf16[64,64], index: 9, kind: input, shape index: {}]
  %s10 = inlined_call_operand.hbm [shape: f32[1,64], index: 10, kind: input, shape index: {}]
  %s11 = inlined_call_operand.hbm [shape: f32[1,64], index: 11, kind: input, shape index: {}]
  %s12 = inlined_call_operand.hbm [shape: bf16[64,128], index: 12, kind: input, shape index: {}]
  %s13 = inlined_call_operand.hbm [shape: bf16[64,128], index: 13, kind: input, shape index: {}]
  %s14 = inlined_call_operand.hbm [shape: bf16[128,64], index: 14, kind: input, shape index: {}]
  %s15 = inlined_call_operand.hbm [shape: f32[2,16,64], index: 15, kind: output, shape index: {}]
  %s16 = sld [smem:[#allocation0]]
  $region153: #{tpu_custom_call.1} parent=0
    _
  %s18 = ssub.s32 1, %s16
  %s19 = scalar_select 0, %s18, %s16
  $region1: #{tpu_custom_call.1} parent=0
    #allocation5 [shape = 'u8[16384]{0}', space=vmem, size = 0x4000, scoped, tag = 'input window, operand 0']
    #allocation6 [shape = 's32[2]{0}', space=sflag, size = 0x8, scoped, tag = 'scoped memory for tpu_custom_call.1']
    #allocation7 [shape = 's32[2]{0}', space=sflag, size = 0x8, scoped, tag = 'scoped memory for tpu_custom_call.1']
    #allocation8 [shape = 'u8[512]{0}', space=vmem, size = 0x400, scoped, tag = 'input window, operand 1, single buffered']
    #allocation9 [shape = 's32[1]{0}', space=sflag, size = 0x4, scoped, tag = 'scoped memory for tpu_custom_call.1']
    #allocation10 [shape = 'u8[512]{0}', space=vmem, size = 0x400, scoped, tag = 'input window, operand 2, single buffered']
    #allocation11 [shape = 'u8[16384]{0}', space=vmem, size = 0x4000, scoped, tag = 'input window, operand 3, single buffered']
    #allocation12 [shape = 's32[1]{0}', space=sflag, size = 0x4, scoped, tag = 'scoped memory for tpu_custom_call.1']
    #allocation13 [shape = 'u8[16384]{0}', space=vmem, size = 0x4000, scoped, tag = 'input window, operand 4, single buffered']
    #allocation14 [shape = 'u8[16384]{0}', space=vmem, size = 0x4000, scoped, tag = 'input window, operand 5, single buffered']
    #allocation15 [shape = 's32[1]{0}', space=sflag, size = 0x4, scoped, tag = 'scoped memory for tpu_custom_call.1']
    #allocation16 [shape = 'u8[16384]{0}', space=vmem, size = 0x4000, scoped, tag = 'input window, operand 6, single buffered']
    #allocation17 [shape = 'u8[8192]{0}', space=vmem, size = 0x2000, scoped, tag = 'input window, operand 7, single buffered']
    #allocation18 [shape = 's32[1]{0}', space=sflag, size = 0x4, scoped, tag = 'scoped memory for tpu_custom_call.1']
    #allocation19 [shape = 'u8[8192]{0}', space=vmem, size = 0x2000, scoped, tag = 'input window, operand 8, single buffered']
    #allocation20 [shape = 'u8[16384]{0}', space=vmem, size = 0x4000, scoped, tag = 'input window, operand 9, single buffered']
    #allocation21 [shape = 's32[1]{0}', space=sflag, size = 0x4, scoped, tag = 'scoped memory for tpu_custom_call.1']
    #allocation22 [shape = 'u8[512]{0}', space=vmem, size = 0x400, scoped, tag = 'input window, operand 10, single buffered']
    #allocation23 [shape = 'u8[512]{0}', space=vmem, size = 0x400, scoped, tag = 'input window, operand 11, single buffered']
    #allocation24 [shape = 's32[1]{0}', space=sflag, size = 0x4, scoped, tag = 'scoped memory for tpu_custom_call.1']
    #allocation25 [shape = 'u8[16384]{0}', space=vmem, size = 0x4000, scoped, tag = 'input window, operand 12, single buffered']
    #allocation26 [shape = 'u8[16384]{0}', space=vmem, size = 0x4000, scoped, tag = 'input window, operand 13, single buffered']
    #allocation27 [shape = 's32[1]{0}', space=sflag, size = 0x4, scoped, tag = 'scoped memory for tpu_custom_call.1']
    #allocation28 [shape = 'u8[32768]{0}', space=vmem, size = 0x8000, scoped, tag = 'input window, operand 14, single buffered']
    #allocation29 [shape = 'u8[16384]{0}', space=vmem, size = 0x4000, scoped, tag = 'output window, operand 0']
    %20 = vsyncpa [#allocation6], 0
    %s21 = scalar_lea.sflag [#allocation6], 1
    %22 = vsyncpa %s21, 0
    %23 = vsyncpa [#allocation9], 0
    %24 = vsyncpa [#allocation12], 0
    %25 = vsyncpa [#allocation15], 0
    %26 = vsyncpa [#allocation18], 0
    %27 = vsyncpa [#allocation21], 0
    %28 = vsyncpa [#allocation24], 0
    %29 = vsyncpa [#allocation27], 0
    %30 = vsyncpa [#allocation7], 0
    %s31 = scalar_lea.sflag [#allocation7], 1
    %32 = vsyncpa %s31, 0
    loop: start=0, step=1, limit=4
    $region2: #{tpu_custom_call.1} parent=1 // loop_pre_header
      _
    $region3: #{tpu_custom_call.1} parent=1 // loop_header
      %s34 = sphi 0, %s38
      %p35 = scmp.ge.s32.totalorder %s34, 4
      %s44 = sphi 0, %s46
      %s47 = sphi 0, %s44
      %s48 = sphi 0, %s47
      %s64 = sphi 0, %s48
      %s68 = sphi 0, %s68
      %s70 = sphi 0, %s68
      %s71 = sphi 0, %s70
      %s85 = sphi 0, %s71
      %s89 = sphi 0, %s89
      %s91 = sphi 0, %s89
      %s92 = sphi 0, %s91
      %s106 = sphi 0, %s92
      %s110 = sphi 0, %s110
      %s112 = sphi 0, %s110
      %s113 = sphi 0, %s112
      %s127 = sphi 0, %s113
      %s131 = sphi 0, %s131
      %s133 = sphi 0, %s131
      %s134 = sphi 0, %s133
      %s148 = sphi 0, %s134
      %s152 = sphi 0, %s152
      %s154 = sphi 0, %s152
      %s155 = sphi 0, %s154
      %s169 = sphi 0, %s155
      %s173 = sphi 0, %s173
      %s175 = sphi 0, %s173
      %s176 = sphi 0, %s175
      %s190 = sphi 0, %s176
      %s194 = sphi 0, %s194
      %s196 = sphi 0, %s194
      %s197 = sphi 0, %s196
      %s211 = sphi 0, %s197
      %s215 = sphi 0, %s215
      %s217 = sphi 0, %s215
      %s218 = sphi 0, %s217
      %s232 = sphi 0, %s218
      %s236 = sphi 0, %s236
      %s238 = sphi 0, %s236
      %s239 = sphi 0, %s238
      %s253 = sphi 0, %s239
      %s257 = sphi 0, %s257
      %s259 = sphi 0, %s257
      %s260 = sphi 0, %s259
      %s274 = sphi 0, %s260
      %s278 = sphi 0, %s278
      %s280 = sphi 0, %s278
      %s281 = sphi 0, %s280
      %s295 = sphi 0, %s281
      %s299 = sphi 0, %s299
      %s301 = sphi 0, %s299
      %s302 = sphi 0, %s301
      %s316 = sphi 0, %s302
      %s320 = sphi 0, %s320
      %s322 = sphi 0, %s320
      %s323 = sphi 0, %s322
      %s337 = sphi 0, %s323
      %s341 = sphi 0, %s341
      %s343 = sphi 0, %s341
      %s344 = sphi 0, %s343
      %s358 = sphi 0, %s344
      %s364 = sphi 0, %s366
      %s367 = sphi 0, %s364
      %s368 = sphi 0, %s367
      %s384 = sphi 0, %s368
    $region4: #{tpu_custom_call.1} parent=1 // loop_header_branch
      %37 = sbr.rel (%p35) target = $region8
    $region5: #{tpu_custom_call.1} parent=1 // loop_body
      %s39 = ssub.s32 %s34, 1
      %s40 = ssub.s32 %s34, 2
      %s41 = sadd.s32 %s34, 1
      %s42 = ssub.s32 %s34, %s41
      %p43 = scmp.eq.s32.totalorder %s42, 0
      %s45 = sadd.s32 %s44, 1
      %s46 = scalar_select %p43, %s44, %s45
      %p49 = pneg %p43
      %p50 = scmp.eq.s32.totalorder %s34, 1
      %p51 = por %p49, %p50
      %p52 = scmp.ne.s32.totalorder %s44, %s47
      %p53 = scmp.eq.s32.totalorder %s34, 0
      %p54 = por %p52, %p53
      %p55 = scmp.ne.s32.totalorder %s44, %s47
      %p56 = scmp.eq.s32.totalorder %s39, 1
      %p57 = por %p55, %p56
      %p58 = scmp.ne.s32.totalorder %s47, %s48
      %p59 = scmp.eq.s32.totalorder %s39, 0
      %p60 = por %p58, %p59
      %p61 = scmp.ne.s32.totalorder %s47, %s48
      %p62 = scmp.eq.s32.totalorder %s40, 1
      %p63 = por %p61, %p62
      %p65 = scmp.ne.s32.totalorder %s48, %s64
      %p66 = scmp.eq.s32.totalorder %s40, 0
      %p67 = por %p65, %p66
      %s69 = sadd.s32 %s68, 1
      %p72 = scmp.eq.s32.totalorder %s34, 1
      %p73 = scmp.ne.s32.totalorder %s68, %s70
      %p74 = scmp.eq.s32.totalorder %s34, 0
      %p75 = por %p73, %p74
      %p76 = scmp.ne.s32.totalorder %s68, %s70
      %p77 = scmp.eq.s32.totalorder %s39, 1
      %p78 = por %p76, %p77
      %p79 = scmp.ne.s32.totalorder %s70, %s71
      %p80 = scmp.eq.s32.totalorder %s39, 0
      %p81 = por %p79, %p80
      %p82 = scmp.ne.s32.totalorder %s70, %s71
      %p83 = scmp.eq.s32.totalorder %s40, 1
      %p84 = por %p82, %p83
      %p86 = scmp.ne.s32.totalorder %s71, %s85
      %p87 = scmp.eq.s32.totalorder %s40, 0
      %p88 = por %p86, %p87
      %s90 = sadd.s32 %s89, 1
      %p93 = scmp.eq.s32.totalorder %s34, 1
      %p94 = scmp.ne.s32.totalorder %s89, %s91
      %p95 = scmp.eq.s32.totalorder %s34, 0
      %p96 = por %p94, %p95
      %p97 = scmp.ne.s32.totalorder %s89, %s91
      %p98 = scmp.eq.s32.totalorder %s39, 1
      %p99 = por %p97, %p98
      %p100 = scmp.ne.s32.totalorder %s91, %s92
      %p101 = scmp.eq.s32.totalorder %s39, 0
      %p102 = por %p100, %p101
      %p103 = scmp.ne.s32.totalorder %s91, %s92
      %p104 = scmp.eq.s32.totalorder %s40, 1
      %p105 = por %p103, %p104
      %p107 = scmp.ne.s32.totalorder %s92, %s106
      %p108 = scmp.eq.s32.totalorder %s40, 0
      %p109 = por %p107, %p108
      %s111 = sadd.s32 %s110, 1
      %p114 = scmp.eq.s32.totalorder %s34, 1
      %p115 = scmp.ne.s32.totalorder %s110, %s112
      %p116 = scmp.eq.s32.totalorder %s34, 0
      %p117 = por %p115, %p116
      %p118 = scmp.ne.s32.totalorder %s110, %s112
      %p119 = scmp.eq.s32.totalorder %s39, 1
      %p120 = por %p118, %p119
      %p121 = scmp.ne.s32.totalorder %s112, %s113
      %p122 = scmp.eq.s32.totalorder %s39, 0
      %p123 = por %p121, %p122
      %p124 = scmp.ne.s32.totalorder %s112, %s113
      %p125 = scmp.eq.s32.totalorder %s40, 1
      %p126 = por %p124, %p125
      %p128 = scmp.ne.s32.totalorder %s113, %s127
      %p129 = scmp.eq.s32.totalorder %s40, 0
      %p130 = por %p128, %p129
      %s132 = sadd.s32 %s131, 1
      %p135 = scmp.eq.s32.totalorder %s34, 1
      %p136 = scmp.ne.s32.totalorder %s131, %s133
      %p137 = scmp.eq.s32.totalorder %s34, 0
      %p138 = por %p136, %p137
      %p139 = scmp.ne.s32.totalorder %s131, %s133
      %p140 = scmp.eq.s32.totalorder %s39, 1
      %p141 = por %p139, %p140
      %p142 = scmp.ne.s32.totalorder %s133, %s134
      %p143 = scmp.eq.s32.totalorder %s39, 0
      %p144 = por %p142, %p143
      %p145 = scmp.ne.s32.totalorder %s133, %s134
      %p146 = scmp.eq.s32.totalorder %s40, 1
      %p147 = por %p145, %p146
      %p149 = scmp.ne.s32.totalorder %s134, %s148
      %p150 = scmp.eq.s32.totalorder %s40, 0
      %p151 = por %p149, %p150
      %s153 = sadd.s32 %s152, 1
      %p156 = scmp.eq.s32.totalorder %s34, 1
      %p157 = scmp.ne.s32.totalorder %s152, %s154
      %p158 = scmp.eq.s32.totalorder %s34, 0
      %p159 = por %p157, %p158
      %p160 = scmp.ne.s32.totalorder %s152, %s154
      %p161 = scmp.eq.s32.totalorder %s39, 1
      %p162 = por %p160, %p161
      %p163 = scmp.ne.s32.totalorder %s154, %s155
      %p164 = scmp.eq.s32.totalorder %s39, 0
      %p165 = por %p163, %p164
      %p166 = scmp.ne.s32.totalorder %s154, %s155
      %p167 = scmp.eq.s32.totalorder %s40, 1
      %p168 = por %p166, %p167
      %p170 = scmp.ne.s32.totalorder %s155, %s169
      %p171 = scmp.eq.s32.totalorder %s40, 0
      %p172 = por %p170, %p171
      %s174 = sadd.s32 %s173, 1
      %p177 = scmp.eq.s32.totalorder %s34, 1
      %p178 = scmp.ne.s32.totalorder %s173, %s175
      %p179 = scmp.eq.s32.totalorder %s34, 0
      %p180 = por %p178, %p179
      %p181 = scmp.ne.s32.totalorder %s173, %s175
      %p182 = scmp.eq.s32.totalorder %s39, 1
      %p183 = por %p181, %p182
      %p184 = scmp.ne.s32.totalorder %s175, %s176
      %p185 = scmp.eq.s32.totalorder %s39, 0
      %p186 = por %p184, %p185
      %p187 = scmp.ne.s32.totalorder %s175, %s176
      %p188 = scmp.eq.s32.totalorder %s40, 1
      %p189 = por %p187, %p188
      %p191 = scmp.ne.s32.totalorder %s176, %s190
      %p192 = scmp.eq.s32.totalorder %s40, 0
      %p193 = por %p191, %p192
      %s195 = sadd.s32 %s194, 1
      %p198 = scmp.eq.s32.totalorder %s34, 1
      %p199 = scmp.ne.s32.totalorder %s194, %s196
      %p200 = scmp.eq.s32.totalorder %s34, 0
      %p201 = por %p199, %p200
      %p202 = scmp.ne.s32.totalorder %s194, %s196
      %p203 = scmp.eq.s32.totalorder %s39, 1
      %p204 = por %p202, %p203
      %p205 = scmp.ne.s32.totalorder %s196, %s197
      %p206 = scmp.eq.s32.totalorder %s39, 0
      %p207 = por %p205, %p206
      %p208 = scmp.ne.s32.totalorder %s196, %s197
      %p209 = scmp.eq.s32.totalorder %s40, 1
      %p210 = por %p208, %p209
      %p212 = scmp.ne.s32.totalorder %s197, %s211
      %p213 = scmp.eq.s32.totalorder %s40, 0
      %p214 = por %p212, %p213
      %s216 = sadd.s32 %s215, 1
      %p219 = scmp.eq.s32.totalorder %s34, 1
      %p220 = scmp.ne.s32.totalorder %s215, %s217
      %p221 = scmp.eq.s32.totalorder %s34, 0
      %p222 = por %p220, %p221
      %p223 = scmp.ne.s32.totalorder %s215, %s217
      %p224 = scmp.eq.s32.totalorder %s39, 1
      %p225 = por %p223, %p224
      %p226 = scmp.ne.s32.totalorder %s217, %s218
      %p227 = scmp.eq.s32.totalorder %s39, 0
      %p228 = por %p226, %p227
      %p229 = scmp.ne.s32.totalorder %s217, %s218
      %p230 = scmp.eq.s32.totalorder %s40, 1
      %p231 = por %p229, %p230
      %p233 = scmp.ne.s32.totalorder %s218, %s232
      %p234 = scmp.eq.s32.totalorder %s40, 0
      %p235 = por %p233, %p234
      %s237 = sadd.s32 %s236, 1
      %p240 = scmp.eq.s32.totalorder %s34, 1
      %p241 = scmp.ne.s32.totalorder %s236, %s238
      %p242 = scmp.eq.s32.totalorder %s34, 0
      %p243 = por %p241, %p242
      %p244 = scmp.ne.s32.totalorder %s236, %s238
      %p245 = scmp.eq.s32.totalorder %s39, 1
      %p246 = por %p244, %p245
      %p247 = scmp.ne.s32.totalorder %s238, %s239
      %p248 = scmp.eq.s32.totalorder %s39, 0
      %p249 = por %p247, %p248
      %p250 = scmp.ne.s32.totalorder %s238, %s239
      %p251 = scmp.eq.s32.totalorder %s40, 1
      %p252 = por %p250, %p251
      %p254 = scmp.ne.s32.totalorder %s239, %s253
      %p255 = scmp.eq.s32.totalorder %s40, 0
      %p256 = por %p254, %p255
      %s258 = sadd.s32 %s257, 1
      %p261 = scmp.eq.s32.totalorder %s34, 1
      %p262 = scmp.ne.s32.totalorder %s257, %s259
      %p263 = scmp.eq.s32.totalorder %s34, 0
      %p264 = por %p262, %p263
      %p265 = scmp.ne.s32.totalorder %s257, %s259
      %p266 = scmp.eq.s32.totalorder %s39, 1
      %p267 = por %p265, %p266
      %p268 = scmp.ne.s32.totalorder %s259, %s260
      %p269 = scmp.eq.s32.totalorder %s39, 0
      %p270 = por %p268, %p269
      %p271 = scmp.ne.s32.totalorder %s259, %s260
      %p272 = scmp.eq.s32.totalorder %s40, 1
      %p273 = por %p271, %p272
      %p275 = scmp.ne.s32.totalorder %s260, %s274
      %p276 = scmp.eq.s32.totalorder %s40, 0
      %p277 = por %p275, %p276
      %s279 = sadd.s32 %s278, 1
      %p282 = scmp.eq.s32.totalorder %s34, 1
      %p283 = scmp.ne.s32.totalorder %s278, %s280
      %p284 = scmp.eq.s32.totalorder %s34, 0
      %p285 = por %p283, %p284
      %p286 = scmp.ne.s32.totalorder %s278, %s280
      %p287 = scmp.eq.s32.totalorder %s39, 1
      %p288 = por %p286, %p287
      %p289 = scmp.ne.s32.totalorder %s280, %s281
      %p290 = scmp.eq.s32.totalorder %s39, 0
      %p291 = por %p289, %p290
      %p292 = scmp.ne.s32.totalorder %s280, %s281
      %p293 = scmp.eq.s32.totalorder %s40, 1
      %p294 = por %p292, %p293
      %p296 = scmp.ne.s32.totalorder %s281, %s295
      %p297 = scmp.eq.s32.totalorder %s40, 0
      %p298 = por %p296, %p297
      %s300 = sadd.s32 %s299, 1
      %p303 = scmp.eq.s32.totalorder %s34, 1
      %p304 = scmp.ne.s32.totalorder %s299, %s301
      %p305 = scmp.eq.s32.totalorder %s34, 0
      %p306 = por %p304, %p305
      %p307 = scmp.ne.s32.totalorder %s299, %s301
      %p308 = scmp.eq.s32.totalorder %s39, 1
      %p309 = por %p307, %p308
      %p310 = scmp.ne.s32.totalorder %s301, %s302
      %p311 = scmp.eq.s32.totalorder %s39, 0
      %p312 = por %p310, %p311
      %p313 = scmp.ne.s32.totalorder %s301, %s302
      %p314 = scmp.eq.s32.totalorder %s40, 1
      %p315 = por %p313, %p314
      %p317 = scmp.ne.s32.totalorder %s302, %s316
      %p318 = scmp.eq.s32.totalorder %s40, 0
      %p319 = por %p317, %p318
      %s321 = sadd.s32 %s320, 1
      %p324 = scmp.eq.s32.totalorder %s34, 1
      %p325 = scmp.ne.s32.totalorder %s320, %s322
      %p326 = scmp.eq.s32.totalorder %s34, 0
      %p327 = por %p325, %p326
      %p328 = scmp.ne.s32.totalorder %s320, %s322
      %p329 = scmp.eq.s32.totalorder %s39, 1
      %p330 = por %p328, %p329
      %p331 = scmp.ne.s32.totalorder %s322, %s323
      %p332 = scmp.eq.s32.totalorder %s39, 0
      %p333 = por %p331, %p332
      %p334 = scmp.ne.s32.totalorder %s322, %s323
      %p335 = scmp.eq.s32.totalorder %s40, 1
      %p336 = por %p334, %p335
      %p338 = scmp.ne.s32.totalorder %s323, %s337
      %p339 = scmp.eq.s32.totalorder %s40, 0
      %p340 = por %p338, %p339
      %s342 = sadd.s32 %s341, 1
      %p345 = scmp.eq.s32.totalorder %s34, 1
      %p346 = scmp.ne.s32.totalorder %s341, %s343
      %p347 = scmp.eq.s32.totalorder %s34, 0
      %p348 = por %p346, %p347
      %p349 = scmp.ne.s32.totalorder %s341, %s343
      %p350 = scmp.eq.s32.totalorder %s39, 1
      %p351 = por %p349, %p350
      %p352 = scmp.ne.s32.totalorder %s343, %s344
      %p353 = scmp.eq.s32.totalorder %s39, 0
      %p354 = por %p352, %p353
      %p355 = scmp.ne.s32.totalorder %s343, %s344
      %p356 = scmp.eq.s32.totalorder %s40, 1
      %p357 = por %p355, %p356
      %p359 = scmp.ne.s32.totalorder %s344, %s358
      %p360 = scmp.eq.s32.totalorder %s40, 0
      %p361 = por %p359, %p360
      %s362 = ssub.s32 %s34, %s41
      %p363 = scmp.eq.s32.totalorder %s362, 0
      %s365 = sadd.s32 %s364, 1
      %s366 = scalar_select %p363, %s364, %s365
      %p369 = pneg %p363
      %p370 = scmp.eq.s32.totalorder %s34, 1
      %p371 = por %p369, %p370
      %p372 = scmp.ne.s32.totalorder %s364, %s367
      %p373 = scmp.eq.s32.totalorder %s34, 0
      %p374 = por %p372, %p373
      %p375 = scmp.ne.s32.totalorder %s364, %s367
      %p376 = scmp.eq.s32.totalorder %s39, 1
      %p377 = por %p375, %p376
      %p378 = scmp.ne.s32.totalorder %s367, %s368
      %p379 = scmp.eq.s32.totalorder %s39, 0
      %p380 = por %p378, %p379
      %p381 = scmp.ne.s32.totalorder %s367, %s368
      %p382 = scmp.eq.s32.totalorder %s40, 1
      %p383 = por %p381, %p382
      %p385 = scmp.ne.s32.totalorder %s368, %s384
      %p386 = scmp.eq.s32.totalorder %s40, 0
      %p387 = por %p385, %p386
      %p388 = scmp.le.s32.totalorder 1, %s34
      %p389 = scmp.lt.s32.totalorder %s34, 3
      %p390 = pnand %p388, %p389
      %p391 = pneg %p390
      // Predicated region
      $region9: #{tpu_custom_call.1} parent=5 // pred_check
        _
      $region10: #{tpu_custom_call.1} parent=5 // pred_check_branch
        %393 = sbr.rel (%p390) target = $region12
      $region11: #{tpu_custom_call.1} parent=5 // pred_region
        %s394 = ssub.s32 %s34, 1
        // Predicated region
        $region13: #{tpu_custom_call.1} parent=11 // pred_check
          %p395 = pneg %p81
        $region14: #{tpu_custom_call.1} parent=11 // pred_check_branch
          %397 = sbr.rel (%p395) target = $region16
        $region15: #{tpu_custom_call.1} parent=11 // pred_region
          %s399 = ssub.s32 16, 16
          %400 = vsyncadd [#allocation9], %s399
          %s402 = sshll.u32 [#allocation8], 4
          %s403 = int_to_ptr.vmem [resolvable:$true] %s402
          %405 = dma.hbm_to_vmem [thread:$0]  %s1, 16, %s403, [#allocation9]
        $region16: #{tpu_custom_call.1} parent=11 // pred_fallthru
          _
        // Predicated region
        $region17: #{tpu_custom_call.1} parent=11 // pred_check
          %p406 = pneg %p102
        $region18: #{tpu_custom_call.1} parent=11 // pred_check_branch
          %408 = sbr.rel (%p406) target = $region20
        $region19: #{tpu_custom_call.1} parent=11 // pred_region
          %s410 = ssub.s32 16, 16
          %411 = vsyncadd [#allocation9], %s410
          %s413 = sshll.u32 [#allocation10], 4
          %s414 = int_to_ptr.vmem [resolvable:$true] %s413
          %416 = dma.hbm_to_vmem [thread:$0]  %s2, 16, %s414, [#allocation9]
        $region20: #{tpu_custom_call.1} parent=11 // pred_fallthru
          _
        // Predicated region
        $region21: #{tpu_custom_call.1} parent=11 // pred_check
          %p417 = pneg %p123
        $region22: #{tpu_custom_call.1} parent=11 // pred_check_branch
          %419 = sbr.rel (%p417) target = $region24
        $region23: #{tpu_custom_call.1} parent=11 // pred_region
          %s421 = ssub.s32 512, 512
          %422 = vsyncadd [#allocation12], %s421
          %s423 = sshll.u32 [#allocation11], 4
          %s424 = int_to_ptr.vmem [resolvable:$true] %s423
          %429 = dma.hbm_to_vmem [thread:$0]  %s3, 512, %s424, [#allocation12], 64, 64, 4
        $region24: #{tpu_custom_call.1} parent=11 // pred_fallthru
          _
        // Predicated region
        $region25: #{tpu_custom_call.1} parent=11 // pred_check
          %p430 = pneg %p144
        $region26: #{tpu_custom_call.1} parent=11 // pred_check_branch
          %432 = sbr.rel (%p430) target = $region28
        $region27: #{tpu_custom_call.1} parent=11 // pred_region
          %s434 = ssub.s32 512, 512
          %435 = vsyncadd [#allocation12], %s434
          %s436 = sshll.u32 [#allocation13], 4
          %s437 = int_to_ptr.vmem [resolvable:$true] %s436
          %442 = dma.hbm_to_vmem [thread:$0]  %s4, 512, %s437, [#allocation12], 64, 64, 4
        $region28: #{tpu_custom_call.1} parent=11 // pred_fallthru
          _
        // Predicated region
        $region29: #{tpu_custom_call.1} parent=11 // pred_check
          %p443 = pneg %p165
        $region30: #{tpu_custom_call.1} parent=11 // pred_check_branch
          %445 = sbr.rel (%p443) target = $region32
        $region31: #{tpu_custom_call.1} parent=11 // pred_region
          %s447 = ssub.s32 512, 512
          %448 = vsyncadd [#allocation15], %s447
          %s449 = sshll.u32 [#allocation14], 4
          %s450 = int_to_ptr.vmem [resolvable:$true] %s449
          %455 = dma.hbm_to_vmem [thread:$0]  %s5, 512, %s450, [#allocation15], 64, 64, 4
        $region32: #{tpu_custom_call.1} parent=11 // pred_fallthru
          _
        // Predicated region
        $region33: #{tpu_custom_call.1} parent=11 // pred_check
          %p456 = pneg %p186
        $region34: #{tpu_custom_call.1} parent=11 // pred_check_branch
          %458 = sbr.rel (%p456) target = $region36
        $region35: #{tpu_custom_call.1} parent=11 // pred_region
          %s460 = ssub.s32 512, 512
          %461 = vsyncadd [#allocation15], %s460
          %s462 = sshll.u32 [#allocation16], 4
          %s463 = int_to_ptr.vmem [resolvable:$true] %s462
          %468 = dma.hbm_to_vmem [thread:$0]  %s6, 512, %s463, [#allocation15], 64, 64, 4
        $region36: #{tpu_custom_call.1} parent=11 // pred_fallthru
          _
        // Predicated region
        $region37: #{tpu_custom_call.1} parent=11 // pred_check
          %p469 = pneg %p207
        $region38: #{tpu_custom_call.1} parent=11 // pred_check_branch
          %471 = sbr.rel (%p469) target = $region40
        $region39: #{tpu_custom_call.1} parent=11 // pred_region
          %s473 = ssub.s32 256, 256
          %474 = vsyncadd [#allocation18], %s473
          %s475 = sshll.u32 [#allocation17], 4
          %s476 = int_to_ptr.vmem [resolvable:$true] %s475
          %481 = dma.hbm_to_vmem [thread:$0]  %s7, 256, %s476, [#allocation18], 128, 128, 8
        $region40: #{tpu_custom_call.1} parent=11 // pred_fallthru
          _
        // Predicated region
        $region41: #{tpu_custom_call.1} parent=11 // pred_check
          %p482 = pneg %p228
        $region42: #{tpu_custom_call.1} parent=11 // pred_check_branch
          %484 = sbr.rel (%p482) target = $region44
        $region43: #{tpu_custom_call.1} parent=11 // pred_region
          %s486 = ssub.s32 256, 256
          %487 = vsyncadd [#allocation18], %s486
          %s488 = sshll.u32 [#allocation19], 4
          %s489 = int_to_ptr.vmem [resolvable:$true] %s488
          %494 = dma.hbm_to_vmem [thread:$0]  %s8, 256, %s489, [#allocation18], 128, 128, 8
        $region44: #{tpu_custom_call.1} parent=11 // pred_fallthru
          _
        // Predicated region
        $region45: #{tpu_custom_call.1} parent=11 // pred_check
          %p495 = pneg %p249
        $region46: #{tpu_custom_call.1} parent=11 // pred_check_branch
          %497 = sbr.rel (%p495) target = $region48
        $region47: #{tpu_custom_call.1} parent=11 // pred_region
          %s499 = ssub.s32 512, 512
          %500 = vsyncadd [#allocation21], %s499
          %s501 = sshll.u32 [#allocation20], 4
          %s502 = int_to_ptr.vmem [resolvable:$true] %s501
          %507 = dma.hbm_to_vmem [thread:$0]  %s9, 512, %s502, [#allocation21], 64, 64, 4
        $region48: #{tpu_custom_call.1} parent=11 // pred_fallthru
          _
        // Predicated region
        $region49: #{tpu_custom_call.1} parent=11 // pred_check
          %p508 = pneg %p270
        $region50: #{tpu_custom_call.1} parent=11 // pred_check_branch
          %510 = sbr.rel (%p508) target = $region52
        $region51: #{tpu_custom_call.1} parent=11 // pred_region
          %s512 = ssub.s32 16, 16
          %513 = vsyncadd [#allocation21], %s512
          %s515 = sshll.u32 [#allocation22], 4
          %s516 = int_to_ptr.vmem [resolvable:$true] %s515
          %518 = dma.hbm_to_vmem [thread:$0]  %s10, 16, %s516, [#allocation21]
        $region52: #{tpu_custom_call.1} parent=11 // pred_fallthru
          _
        // Predicated region
        $region53: #{tpu_custom_call.1} parent=11 // pred_check
          %p519 = pneg %p291
        $region54: #{tpu_custom_call.1} parent=11 // pred_check_branch
          %521 = sbr.rel (%p519) target = $region56
        $region55: #{tpu_custom_call.1} parent=11 // pred_region
          %s523 = ssub.s32 16, 16
          %524 = vsyncadd [#allocation24], %s523
          %s526 = sshll.u32 [#allocation23], 4
          %s527 = int_to_ptr.vmem [resolvable:$true] %s526
          %529 = dma.hbm_to_vmem [thread:$0]  %s11, 16, %s527, [#allocation24]
        $region56: #{tpu_custom_call.1} parent=11 // pred_fallthru
          _
        // Predicated region
        $region57: #{tpu_custom_call.1} parent=11 // pred_check
          %p530 = pneg %p312
        $region58: #{tpu_custom_call.1} parent=11 // pred_check_branch
          %532 = sbr.rel (%p530) target = $region60
        $region59: #{tpu_custom_call.1} parent=11 // pred_region
          %s534 = ssub.s32 512, 512
          %535 = vsyncadd [#allocation24], %s534
          %s536 = sshll.u32 [#allocation25], 4
          %s537 = int_to_ptr.vmem [resolvable:$true] %s536
          %542 = dma.hbm_to_vmem [thread:$0]  %s12, 512, %s537, [#allocation24], 64, 64, 4
        $region60: #{tpu_custom_call.1} parent=11 // pred_fallthru
          _
        // Predicated region
        $region61: #{tpu_custom_call.1} parent=11 // pred_check
          %p543 = pneg %p333
        $region62: #{tpu_custom_call.1} parent=11 // pred_check_branch
          %545 = sbr.rel (%p543) target = $region64
        $region63: #{tpu_custom_call.1} parent=11 // pred_region
          %s547 = ssub.s32 512, 512
          %548 = vsyncadd [#allocation27], %s547
          %s549 = sshll.u32 [#allocation26], 4
          %s550 = int_to_ptr.vmem [resolvable:$true] %s549
          %555 = dma.hbm_to_vmem [thread:$0]  %s13, 512, %s550, [#allocation27], 64, 64, 4
        $region64: #{tpu_custom_call.1} parent=11 // pred_fallthru
          _
        // Predicated region
        $region65: #{tpu_custom_call.1} parent=11 // pred_check
          %p556 = pneg %p354
        $region66: #{tpu_custom_call.1} parent=11 // pred_check_branch
          %558 = sbr.rel (%p556) target = $region68
        $region67: #{tpu_custom_call.1} parent=11 // pred_region
          %s560 = ssub.s32 1024, 1024
          %561 = vsyncadd [#allocation27], %s560
          %s562 = sshll.u32 [#allocation28], 4
          %s563 = int_to_ptr.vmem [resolvable:$true] %s562
          %568 = dma.hbm_to_vmem [thread:$0]  %s14, 1024, %s563, [#allocation27], 64, 64, 4
        $region68: #{tpu_custom_call.1} parent=11 // pred_fallthru
          _
      $region12: #{tpu_custom_call.1} parent=5 // pred_fallthru
        _
      %p569 = scmp.lt.s32.totalorder %s34, 2
      // Predicated region
      $region69: #{tpu_custom_call.1} parent=5 // pred_check
        %p570 = pneg %p569
      $region70: #{tpu_custom_call.1} parent=5 // pred_check_branch
        %572 = sbr.rel (%p570) target = $region72
      $region71: #{tpu_custom_call.1} parent=5 // pred_region
        // Predicated region
        $region73: #{tpu_custom_call.1} parent=71 // pred_check
          %p573 = pneg %p54
        $region74: #{tpu_custom_call.1} parent=71 // pred_check_branch
          %575 = sbr.rel (%p573) target = $region76
        $region75: #{tpu_custom_call.1} parent=71 // pred_region
          %s576 = sand.u32 %s44, 1
          %s577 = scalar_lea.sflag [#allocation6], %s576
          %s578 = sand.u32 %s44, 1
          %s579 = smul.addr %s578, 16
          %s580 = scalar_lea.vmem [#allocation5], %s579
          %s582 = ssub.s32 256, 256
          %583 = vsyncadd %s577, %s582
          %s584 = smul.addr %s34, 2
          %s585 = smul.addr %s584, 128
          %s586 = scalar_lea.hbm %s0, %s585
          %s587 = sshll.u32 %s580, 4
          %s588 = int_to_ptr.vmem [resolvable:$true] %s587
          %593 = dma.hbm_to_vmem [thread:$0]  %s586, 256, %s588, %s577, 128, 128, 8
        $region76: #{tpu_custom_call.1} parent=71 // pred_fallthru
          _
      $region72: #{tpu_custom_call.1} parent=5 // pred_fallthru
        _
      %p594 = scmp.le.s32.totalorder 1, %s34
      %p595 = scmp.lt.s32.totalorder %s34, 3
      %p596 = pnand %p594, %p595
      %p597 = pneg %p596
      // Predicated region
      $region77: #{tpu_custom_call.1} parent=5 // pred_check
        _
      $region78: #{tpu_custom_call.1} parent=5 // pred_check_branch
        %599 = sbr.rel (%p596) target = $region80
      $region79: #{tpu_custom_call.1} parent=5 // pred_region
        %s600 = ssub.s32 %s34, 1
        %s601 = sand.u32 %s47, 1
        %s602 = scalar_lea.sflag [#allocation6], %s601
        %s603 = sand.u32 %s47, 1
        %s604 = smul.addr %s603, 16
        %s605 = scalar_lea.vmem [#allocation5], %s604
        // Predicated region
        $region81: #{tpu_custom_call.1} parent=79 // pred_check
          %p606 = pneg %p60
        $region82: #{tpu_custom_call.1} parent=79 // pred_check_branch
          %608 = sbr.rel (%p606) target = $region84
        $region83: #{tpu_custom_call.1} parent=79 // pred_region
          %609 = dma.done %s602, 256
        $region84: #{tpu_custom_call.1} parent=79 // pred_fallthru
          _
        // Predicated region
        $region85: #{tpu_custom_call.1} parent=79 // pred_check
          %p610 = pneg %p81
        $region86: #{tpu_custom_call.1} parent=79 // pred_check_branch
          %612 = sbr.rel (%p610) target = $region88
        $region87: #{tpu_custom_call.1} parent=79 // pred_region
          %613 = dma.done [#allocation9], 16
        $region88: #{tpu_custom_call.1} parent=79 // pred_fallthru
          _
        // Predicated region
        $region89: #{tpu_custom_call.1} parent=79 // pred_check
          %p614 = pneg %p102
        $region90: #{tpu_custom_call.1} parent=79 // pred_check_branch
          %616 = sbr.rel (%p614) target = $region92
        $region91: #{tpu_custom_call.1} parent=79 // pred_region
          %617 = dma.done [#allocation9], 16
        $region92: #{tpu_custom_call.1} parent=79 // pred_fallthru
          _
        // Predicated region
        $region93: #{tpu_custom_call.1} parent=79 // pred_check
          %p618 = pneg %p123
        $region94: #{tpu_custom_call.1} parent=79 // pred_check_branch
          %620 = sbr.rel (%p618) target = $region96
        $region95: #{tpu_custom_call.1} parent=79 // pred_region
          %621 = dma.done [#allocation12], 512
        $region96: #{tpu_custom_call.1} parent=79 // pred_fallthru
          _
        // Predicated region
        $region97: #{tpu_custom_call.1} parent=79 // pred_check
          %p622 = pneg %p144
        $region98: #{tpu_custom_call.1} parent=79 // pred_check_branch
          %624 = sbr.rel (%p622) target = $region100
        $region99: #{tpu_custom_call.1} parent=79 // pred_region
          %625 = dma.done [#allocation12], 512
        $region100: #{tpu_custom_call.1} parent=79 // pred_fallthru
          _
        // Predicated region
        $region101: #{tpu_custom_call.1} parent=79 // pred_check
          %p626 = pneg %p165
        $region102: #{tpu_custom_call.1} parent=79 // pred_check_branch
          %628 = sbr.rel (%p626) target = $region104
        $region103: #{tpu_custom_call.1} parent=79 // pred_region
          %629 = dma.done [#allocation15], 512
        $region104: #{tpu_custom_call.1} parent=79 // pred_fallthru
          _
        // Predicated region
        $region105: #{tpu_custom_call.1} parent=79 // pred_check
          %p630 = pneg %p186
        $region106: #{tpu_custom_call.1} parent=79 // pred_check_branch
          %632 = sbr.rel (%p630) target = $region108
        $region107: #{tpu_custom_call.1} parent=79 // pred_region
          %633 = dma.done [#allocation15], 512
        $region108: #{tpu_custom_call.1} parent=79 // pred_fallthru
          _
        // Predicated region
        $region109: #{tpu_custom_call.1} parent=79 // pred_check
          %p634 = pneg %p207
        $region110: #{tpu_custom_call.1} parent=79 // pred_check_branch
          %636 = sbr.rel (%p634) target = $region112
        $region111: #{tpu_custom_call.1} parent=79 // pred_region
          %637 = dma.done [#allocation18], 256
        $region112: #{tpu_custom_call.1} parent=79 // pred_fallthru
          _
        // Predicated region
        $region113: #{tpu_custom_call.1} parent=79 // pred_check
          %p638 = pneg %p228
        $region114: #{tpu_custom_call.1} parent=79 // pred_check_branch
          %640 = sbr.rel (%p638) target = $region116
        $region115: #{tpu_custom_call.1} parent=79 // pred_region
          %641 = dma.done [#allocation18], 256
        $region116: #{tpu_custom_call.1} parent=79 // pred_fallthru
          _
        // Predicated region
        $region117: #{tpu_custom_call.1} parent=79 // pred_check
          %p642 = pneg %p249
        $region118: #{tpu_custom_call.1} parent=79 // pred_check_branch
          %644 = sbr.rel (%p642) target = $region120
        $region119: #{tpu_custom_call.1} parent=79 // pred_region
          %645 = dma.done [#allocation21], 512
        $region120: #{tpu_custom_call.1} parent=79 // pred_fallthru
          _
        // Predicated region
        $region121: #{tpu_custom_call.1} parent=79 // pred_check
          %p646 = pneg %p270
        $region122: #{tpu_custom_call.1} parent=79 // pred_check_branch
          %648 = sbr.rel (%p646) target = $region124
        $region123: #{tpu_custom_call.1} parent=79 // pred_region
          %649 = dma.done [#allocation21], 16
        $region124: #{tpu_custom_call.1} parent=79 // pred_fallthru
          _
        // Predicated region
        $region125: #{tpu_custom_call.1} parent=79 // pred_check
          %p650 = pneg %p291
        $region126: #{tpu_custom_call.1} parent=79 // pred_check_branch
          %652 = sbr.rel (%p650) target = $region128
        $region127: #{tpu_custom_call.1} parent=79 // pred_region
          %653 = dma.done [#allocation24], 16
        $region128: #{tpu_custom_call.1} parent=79 // pred_fallthru
          _
        // Predicated region
        $region129: #{tpu_custom_call.1} parent=79 // pred_check
          %p654 = pneg %p312
        $region130: #{tpu_custom_call.1} parent=79 // pred_check_branch
          %656 = sbr.rel (%p654) target = $region132
        $region131: #{tpu_custom_call.1} parent=79 // pred_region
          %657 = dma.done [#allocation24], 512
        $region132: #{tpu_custom_call.1} parent=79 // pred_fallthru
          _
        // Predicated region
        $region133: #{tpu_custom_call.1} parent=79 // pred_check
          %p658 = pneg %p333
        $region134: #{tpu_custom_call.1} parent=79 // pred_check_branch
          %660 = sbr.rel (%p658) target = $region136
        $region135: #{tpu_custom_call.1} parent=79 // pred_region
          %661 = dma.done [#allocation27], 512
        $region136: #{tpu_custom_call.1} parent=79 // pred_fallthru
          _
        // Predicated region
        $region137: #{tpu_custom_call.1} parent=79 // pred_check
          %p662 = pneg %p354
        $region138: #{tpu_custom_call.1} parent=79 // pred_check_branch
          %664 = sbr.rel (%p662) target = $region140
        $region139: #{tpu_custom_call.1} parent=79 // pred_region
          %665 = dma.done [#allocation27], 1024
        $region140: #{tpu_custom_call.1} parent=79 // pred_fallthru
          _
        %s666 = sand.u32 %s47, 1
        %s667 = scalar_lea.sflag [#allocation6], %s666
        %s668 = sand.u32 %s47, 1
        %s669 = smul.addr %s668, 16
        %s670 = scalar_lea.vmem [#allocation5], %s669
        %p671 = pneg %p60
        %p672 = pneg %p57
        %p673 = pneg %p81
        %p674 = pneg %p78
        %p675 = pneg %p102
        %p676 = pneg %p99
        %p677 = pneg %p123
        %p678 = pneg %p120
        %p679 = pneg %p144
        %p680 = pneg %p141
        %p681 = pneg %p165
        %p682 = pneg %p162
        %p683 = pneg %p186
        %p684 = pneg %p183
        %p685 = pneg %p207
        %p686 = pneg %p204
        %p687 = pneg %p228
        %p688 = pneg %p225
        %p689 = pneg %p249
        %p690 = pneg %p246
        %p691 = pneg %p270
        %p692 = pneg %p267
        %p693 = pneg %p291
        %p694 = pneg %p288
        %p695 = pneg %p312
        %p696 = pneg %p309
        %p697 = pneg %p333
        %p698 = pneg %p330
        %p699 = pneg %p354
        %p700 = pneg %p351
        %p701 = pneg %p380
        %p702 = pneg %p377
        %s703 = sand.u32 %s367, 1
        %s704 = scalar_lea.sflag [#allocation7], %s703
        %s705 = sand.u32 %s367, 1
        %s706 = smul.addr %s705, 16
        %s707 = scalar_lea.vmem [#allocation29], %s706
        %v709 = vld [vmem:[%s605] sm:$0xff]
        %v710 = vld [vmem:[%s605 + $0x8] sm:$0xff]
        %vm711 = vcmask 523264
        %v712 = vsel %vm711, %v709, 0.0
        %713 = vadd.xlane.f32.xlu0 %v712
        %v714 = vpop.xlane.xlu0 %713
        %v715 = vsel %vm711, %v710, 0.0
        %716 = vadd.xlane.f32.xlu0 %v715
        %v717 = vpop.xlane.xlu0 %716
        %v718 = vrcp.pop 64.0
        %v719 = vmul.f32 %v714, %v718
        %v720 = vmul.f32 %v717, %v718
        %v721 = vsub.f32 %v709, %v719
        %v722 = vsub.f32 %v710, %v720
        %v723 = vmul.f32 %v721, %v721
        %v724 = vmul.f32 %v722, %v722
        %v725 = vsel %vm711, %v723, 0.0
        %726 = vadd.xlane.f32.xlu0 %v725
        %v727 = vpop.xlane.xlu0 %726
        %v728 = vsel %vm711, %v724, 0.0
        %729 = vadd.xlane.f32.xlu0 %v728
        %v730 = vpop.xlane.xlu0 %729
        %v731 = vmul.f32 %v727, %v718
        %v732 = vmul.f32 %v730, %v718
        %v733 = vadd.f32 %v731, 1e-05
        %v734 = vadd.f32 %v732, 1e-05
        %v735 = vrsqrt.pop %v733
        %v736 = vrsqrt.pop %v734
        %v737 = vmul.f32 %v721, %v735
        %v738 = vmul.f32 %v722, %v736
        %v739 = vld [vmem:[#allocation8] sm:$0x1]
        %v741 = vlaneseq
        %v742 = vshrl.u32 %v741, 7
        %v743 = vsub.s32 0, %v742
        %v744 = vrot.slane %v739, %v743
        %v746 = vmul.f32 %v737, %v744
        %v747 = vmul.f32 %v738, %v744
        %v748 = vld [vmem:[#allocation10] sm:$0x1]
        %v750 = vlaneseq
        %v751 = vshrl.u32 %v750, 7
        %v752 = vsub.s32 0, %v751
        %v753 = vrot.slane %v748, %v752
        %v755 = vadd.f32 %v746, %v753
        %v756 = vadd.f32 %v747, %v753
        %v757 = vpack.c.bf16 %v756, %v755
        %v758 = vld [vmem:[#allocation11] sm:$0xf]
        %v759 = vld [vmem:[#allocation11 + $0x4] sm:$0xf]
        %v760 = vld [vmem:[#allocation11 + $0x8] sm:$0xf]
        %v761 = vld [vmem:[#allocation11 + $0xc] sm:$0xf]
        %v762 = vld [vmem:[#allocation11 + $0x10] sm:$0xf]
        %v763 = vld [vmem:[#allocation11 + $0x14] sm:$0xf]
        %v764 = vld [vmem:[#allocation11 + $0x18] sm:$0xf]
        %v765 = vld [vmem:[#allocation11 + $0x1c] sm:$0xf]
        %v774 = vunpack.c.l.b16 %v758
        %v775 = vunpack.c.l.b16 %v759
        %v776 = vunpack.c.l.b16 %v760
        %v777 = vunpack.c.l.b16 %v761
        %v778 = vunpack.c.l.b16 %v762
        %v779 = vunpack.c.l.b16 %v763
        %v780 = vunpack.c.l.b16 %v764
        %v781 = vunpack.c.l.b16 %v765
        %v782 = vpack.c.b16 %v775, %v774
        %v783 = vpack.c.b16 %v777, %v776
        %v784 = vpack.c.b16 %v779, %v778
        %v785 = vpack.c.b16 %v781, %v780
        %v791 = vsel %vm711, %v757, 0
        %793 = vmatprep.subr.bf16.mxu0 0
        %794 = vmatpush1.bf16.msra.mxu0 %v782
        %795 = vmatprep.subr.bf16.mxu0 0
        %796 = vmatpush1.bf16.msra.mxu0 %v783
        %797 = vmatprep.subr.bf16.mxu0 0
        %798 = vmatpush1.bf16.msra.mxu0 %v784
        %799 = vmatprep.subr.bf16.mxu0 0
        %800 = vmatpush1.bf16.msra.mxu0 %v785
        %801 = vmatprep.subr.bf16.mxu0 0
        %802 = vmatpush1.bf16.msra.mxu0 0
        %803 = vmatprep.subr.bf16.mxu0 0
        %804 = vmatpush1.bf16.msra.mxu0 0
        %805 = vmatprep.subr.bf16.mxu0 0
        %806 = vmatpush1.bf16.msra.mxu0 0
        %807 = vmatprep.subr.bf16.mxu0 0
        %808 = vmatpush1.bf16.msra.mxu0 0
        %809 = vmatprep.subr.bf16.mxu0 0
        %810 = vmatpush1.bf16.msra.mxu0 0
        %811 = vmatprep.subr.bf16.mxu0 0
        %812 = vmatpush1.bf16.msra.mxu0 0
        %813 = vmatprep.subr.bf16.mxu0 0
        %814 = vmatpush1.bf16.msra.mxu0 0
        %815 = vmatprep.subr.bf16.mxu0 0
        %816 = vmatpush1.bf16.msra.mxu0 0
        %817 = vmatprep.subr.bf16.mxu0 0
        %818 = vmatpush1.bf16.msra.mxu0 0
        %819 = vmatprep.subr.bf16.mxu0 0
        %820 = vmatpush1.bf16.msra.mxu0 0
        %821 = vmatprep.subr.bf16.mxu0 0
        %822 = vmatpush1.bf16.msra.mxu0 0
        %823 = vmatprep.subr.bf16.mxu0 0
        %824 = vmatpush1.bf16.msra.mxu0 0
        %825 = vmatprep.mubr.bf16.mxu0 0
        %826 = vmatmul.mubr.bf16.gmra.mrb[0].mxu0 %v791
        %v827 = vpop.f32.mrb[0].mxu0
        %v828 = vadd.f32 0.0, %v827
        %v829 = vpop.f32.mrb[0].mxu0
        %v830 = vpop.f32.mrb[0].mxu0
        %v831 = vadd.f32 0.0, %v830
        %v832 = vpop.f32.mrb[0].mxu0
        %833 = vdwg.mxu0
        %v834 = vld [vmem:[#allocation13] sm:$0xf]
        %v835 = vld [vmem:[#allocation13 + $0x4] sm:$0xf]
        %v836 = vld [vmem:[#allocation13 + $0x8] sm:$0xf]
        %v837 = vld [vmem:[#allocation13 + $0xc] sm:$0xf]
        %v838 = vld [vmem:[#allocation13 + $0x10] sm:$0xf]
        %v839 = vld [vmem:[#allocation13 + $0x14] sm:$0xf]
        %v840 = vld [vmem:[#allocation13 + $0x18] sm:$0xf]
        %v841 = vld [vmem:[#allocation13 + $0x1c] sm:$0xf]
        %v850 = vunpack.c.l.b16 %v834
        %v851 = vunpack.c.l.b16 %v835
        %v852 = vunpack.c.l.b16 %v836
        %v853 = vunpack.c.l.b16 %v837
        %v854 = vunpack.c.l.b16 %v838
        %v855 = vunpack.c.l.b16 %v839
        %v856 = vunpack.c.l.b16 %v840
        %v857 = vunpack.c.l.b16 %v841
        %v858 = vpack.c.b16 %v851, %v850
        %v859 = vpack.c.b16 %v853, %v852
        %v860 = vpack.c.b16 %v855, %v854
        %v861 = vpack.c.b16 %v857, %v856
        %866 = vmatprep.subr.bf16.mxu0 0
        %867 = vmatpush1.bf16.msra.mxu0 %v858
        %868 = vmatprep.subr.bf16.mxu0 0
        %869 = vmatpush1.bf16.msra.mxu0 %v859
        %870 = vmatprep.subr.bf16.mxu0 0
        %871 = vmatpush1.bf16.msra.mxu0 %v860
        %872 = vmatprep.subr.bf16.mxu0 0
        %873 = vmatpush1.bf16.msra.mxu0 %v861
        %874 = vmatprep.subr.bf16.mxu0 0
        %875 = vmatpush1.bf16.msra.mxu0 0
        %876 = vmatprep.subr.bf16.mxu0 0
        %877 = vmatpush1.bf16.msra.mxu0 0
        %878 = vmatprep.subr.bf16.mxu0 0
        %879 = vmatpush1.bf16.msra.mxu0 0
        %880 = vmatprep.subr.bf16.mxu0 0
        %881 = vmatpush1.bf16.msra.mxu0 0
        %882 = vmatprep.subr.bf16.mxu0 0
        %883 = vmatpush1.bf16.msra.mxu0 0
        %884 = vmatprep.subr.bf16.mxu0 0
        %885 = vmatpush1.bf16.msra.mxu0 0
        %886 = vmatprep.subr.bf16.mxu0 0
        %887 = vmatpush1.bf16.msra.mxu0 0
        %888 = vmatprep.subr.bf16.mxu0 0
        %889 = vmatpush1.bf16.msra.mxu0 0
        %890 = vmatprep.subr.bf16.mxu0 0
        %891 = vmatpush1.bf16.msra.mxu0 0
        %892 = vmatprep.subr.bf16.mxu0 0
        %893 = vmatpush1.bf16.msra.mxu0 0
        %894 = vmatprep.subr.bf16.mxu0 0
        %895 = vmatpush1.bf16.msra.mxu0 0
        %896 = vmatprep.subr.bf16.mxu0 0
        %897 = vmatpush1.bf16.msra.mxu0 0
        %898 = vmatprep.mubr.bf16.mxu0 0
        %899 = vmatmul.mubr.bf16.gmra.mrb[0].mxu0 %v791
        %v900 = vpop.f32.mrb[0].mxu0
        %v901 = vadd.f32 0.0, %v900
        %v902 = vpop.f32.mrb[0].mxu0
        %v903 = vpop.f32.mrb[0].mxu0
        %v904 = vadd.f32 0.0, %v903
        %v905 = vpop.f32.mrb[0].mxu0
        %906 = vdwg.mxu0
        %v907 = vld [vmem:[#allocation14] sm:$0xf]
        %v908 = vld [vmem:[#allocation14 + $0x4] sm:$0xf]
        %v909 = vld [vmem:[#allocation14 + $0x8] sm:$0xf]
        %v910 = vld [vmem:[#allocation14 + $0xc] sm:$0xf]
        %v911 = vld [vmem:[#allocation14 + $0x10] sm:$0xf]
        %v912 = vld [vmem:[#allocation14 + $0x14] sm:$0xf]
        %v913 = vld [vmem:[#allocation14 + $0x18] sm:$0xf]
        %v914 = vld [vmem:[#allocation14 + $0x1c] sm:$0xf]
        %v923 = vunpack.c.l.b16 %v907
        %v924 = vunpack.c.l.b16 %v908
        %v925 = vunpack.c.l.b16 %v909
        %v926 = vunpack.c.l.b16 %v910
        %v927 = vunpack.c.l.b16 %v911
        %v928 = vunpack.c.l.b16 %v912
        %v929 = vunpack.c.l.b16 %v913
        %v930 = vunpack.c.l.b16 %v914
        %v931 = vpack.c.b16 %v924, %v923
        %v932 = vpack.c.b16 %v926, %v925
        %v933 = vpack.c.b16 %v928, %v927
        %v934 = vpack.c.b16 %v930, %v929
        %939 = vmatprep.subr.bf16.mxu0 0
        %940 = vmatpush1.bf16.msra.mxu0 %v931
        %941 = vmatprep.subr.bf16.mxu0 0
        %942 = vmatpush1.bf16.msra.mxu0 %v932
        %943 = vmatprep.subr.bf16.mxu0 0
        %944 = vmatpush1.bf16.msra.mxu0 %v933
        %945 = vmatprep.subr.bf16.mxu0 0
        %946 = vmatpush1.bf16.msra.mxu0 %v934
        %947 = vmatprep.subr.bf16.mxu0 0
        %948 = vmatpush1.bf16.msra.mxu0 0
        %949 = vmatprep.subr.bf16.mxu0 0
        %950 = vmatpush1.bf16.msra.mxu0 0
        %951 = vmatprep.subr.bf16.mxu0 0
        %952 = vmatpush1.bf16.msra.mxu0 0
        %953 = vmatprep.subr.bf16.mxu0 0
        %954 = vmatpush1.bf16.msra.mxu0 0
        %955 = vmatprep.subr.bf16.mxu0 0
        %956 = vmatpush1.bf16.msra.mxu0 0
        %957 = vmatprep.subr.bf16.mxu0 0
        %958 = vmatpush1.bf16.msra.mxu0 0
        %959 = vmatprep.subr.bf16.mxu0 0
        %960 = vmatpush1.bf16.msra.mxu0 0
        %961 = vmatprep.subr.bf16.mxu0 0
        %962 = vmatpush1.bf16.msra.mxu0 0
        %963 = vmatprep.subr.bf16.mxu0 0
        %964 = vmatpush1.bf16.msra.mxu0 0
        %965 = vmatprep.subr.bf16.mxu0 0
        %966 = vmatpush1.bf16.msra.mxu0 0
        %967 = vmatprep.subr.bf16.mxu0 0
        %968 = vmatpush1.bf16.msra.mxu0 0
        %969 = vmatprep.subr.bf16.mxu0 0
        %970 = vmatpush1.bf16.msra.mxu0 0
        %971 = vmatprep.mubr.bf16.mxu0 0
        %972 = vmatmul.mubr.bf16.gmra.mrb[0].mxu0 %v791
        %v973 = vpop.f32.mrb[0].mxu0
        %v974 = vadd.f32 0.0, %v973
        %v975 = vpop.f32.mrb[0].mxu0
        %v976 = vpop.f32.mrb[0].mxu0
        %v977 = vadd.f32 0.0, %v976
        %v978 = vpop.f32.mrb[0].mxu0
        %979 = vdwg.mxu0
        %v980 = vld [vmem:[#allocation20] sm:$0xf]
        %v981 = vld [vmem:[#allocation20 + $0x4] sm:$0xf]
        %v982 = vld [vmem:[#allocation20 + $0x8] sm:$0xf]
        %v983 = vld [vmem:[#allocation20 + $0xc] sm:$0xf]
        %v984 = vld [vmem:[#allocation20 + $0x10] sm:$0xf]
        %v985 = vld [vmem:[#allocation20 + $0x14] sm:$0xf]
        %v986 = vld [vmem:[#allocation20 + $0x18] sm:$0xf]
        %v987 = vld [vmem:[#allocation20 + $0x1c] sm:$0xf]
        %v988 = vld [vmem:[#allocation17] sm:$0xff]
        %v989 = vld [vmem:[#allocation17 + $0x8] sm:$0xff]
        %v990 = vld [vmem:[#allocation19] sm:$0xff]
        %v991 = vld [vmem:[#allocation19 + $0x8] sm:$0xff]
        %v992 = vpack.c.bf16 %v831, %v828
        %v1001 = vunpack.c.l.b16 %v980
        %v1002 = vunpack.c.l.b16 %v981
        %v1003 = vunpack.c.l.b16 %v982
        %v1004 = vunpack.c.l.b16 %v983
        %v1005 = vunpack.c.l.b16 %v984
        %v1006 = vunpack.c.l.b16 %v985
        %v1007 = vunpack.c.l.b16 %v986
        %v1008 = vunpack.c.l.b16 %v987
        %v1009 = vpack.c.b16 %v1002, %v1001
        %v1010 = vpack.c.b16 %v1004, %v1003
        %v1011 = vpack.c.b16 %v1006, %v1005
        %v1012 = vpack.c.b16 %v1008, %v1007
        %v1018 = vsel %vm711, %v992, 0
        %1020 = vmatprep.subr.bf16.mxu0 0
        %1021 = vmatpush1.bf16.msra.mxu0 %v1009
        %1022 = vmatprep.subr.bf16.mxu0 0
        %1023 = vmatpush1.bf16.msra.mxu0 %v1010
        %1024 = vmatprep.subr.bf16.mxu0 0
        %1025 = vmatpush1.bf16.msra.mxu0 %v1011
        %1026 = vmatprep.subr.bf16.mxu0 0
        %1027 = vmatpush1.bf16.msra.mxu0 %v1012
        %1028 = vmatprep.subr.bf16.mxu0 0
        %1029 = vmatpush1.bf16.msra.mxu0 0
        %1030 = vmatprep.subr.bf16.mxu0 0
        %1031 = vmatpush1.bf16.msra.mxu0 0
        %1032 = vmatprep.subr.bf16.mxu0 0
        %1033 = vmatpush1.bf16.msra.mxu0 0
        %1034 = vmatprep.subr.bf16.mxu0 0
        %1035 = vmatpush1.bf16.msra.mxu0 0
        %1036 = vmatprep.subr.bf16.mxu0 0
        %1037 = vmatpush1.bf16.msra.mxu0 0
        %1038 = vmatprep.subr.bf16.mxu0 0
        %1039 = vmatpush1.bf16.msra.mxu0 0
        %1040 = vmatprep.subr.bf16.mxu0 0
        %1041 = vmatpush1.bf16.msra.mxu0 0
        %1042 = vmatprep.subr.bf16.mxu0 0
        %1043 = vmatpush1.bf16.msra.mxu0 0
        %1044 = vmatprep.subr.bf16.mxu0 0
        %1045 = vmatpush1.bf16.msra.mxu0 0
        %1046 = vmatprep.subr.bf16.mxu0 0
        %1047 = vmatpush1.bf16.msra.mxu0 0
        %1048 = vmatprep.subr.bf16.mxu0 0
        %1049 = vmatpush1.bf16.msra.mxu0 0
        %1050 = vmatprep.subr.bf16.mxu0 0
        %1051 = vmatpush1.bf16.msra.mxu0 0
        %1052 = vmatprep.mubr.bf16.mxu0 0
        %1053 = vmatmul.mubr.bf16.gmra.mrb[0].mxu0 %v1018
        %v1054 = vpop.f32.mrb[0].mxu0
        %v1055 = vadd.f32 0.0, %v1054
        %v1056 = vpop.f32.mrb[0].mxu0
        %v1057 = vpop.f32.mrb[0].mxu0
        %v1058 = vadd.f32 0.0, %v1057
        %v1059 = vpop.f32.mrb[0].mxu0
        %1060 = vdwg.mxu0
        %v1061 = vpack.c.bf16 %v904, %v901
        %v1063 = vsel %vm711, %v1061, 0
        %1065 = vmatprep.subr.bf16.mxu0 0
        %1066 = vmatpush1.bf16.msra.mxu0 %v1009
        %1067 = vmatprep.subr.bf16.mxu0 0
        %1068 = vmatpush1.bf16.msra.mxu0 %v1010
        %1069 = vmatprep.subr.bf16.mxu0 0
        %1070 = vmatpush1.bf16.msra.mxu0 %v1011
        %1071 = vmatprep.subr.bf16.mxu0 0
        %1072 = vmatpush1.bf16.msra.mxu0 %v1012
        %1073 = vmatprep.subr.bf16.mxu0 0
        %1074 = vmatpush1.bf16.msra.mxu0 0
        %1075 = vmatprep.subr.bf16.mxu0 0
        %1076 = vmatpush1.bf16.msra.mxu0 0
        %1077 = vmatprep.subr.bf16.mxu0 0
        %1078 = vmatpush1.bf16.msra.mxu0 0
        %1079 = vmatprep.subr.bf16.mxu0 0
        %1080 = vmatpush1.bf16.msra.mxu0 0
        %1081 = vmatprep.subr.bf16.mxu0 0
        %1082 = vmatpush1.bf16.msra.mxu0 0
        %1083 = vmatprep.subr.bf16.mxu0 0
        %1084 = vmatpush1.bf16.msra.mxu0 0
        %1085 = vmatprep.subr.bf16.mxu0 0
        %1086 = vmatpush1.bf16.msra.mxu0 0
        %1087 = vmatprep.subr.bf16.mxu0 0
        %1088 = vmatpush1.bf16.msra.mxu0 0
        %1089 = vmatprep.subr.bf16.mxu0 0
        %1090 = vmatpush1.bf16.msra.mxu0 0
        %1091 = vmatprep.subr.bf16.mxu0 0
        %1092 = vmatpush1.bf16.msra.mxu0 0
        %1093 = vmatprep.subr.bf16.mxu0 0
        %1094 = vmatpush1.bf16.msra.mxu0 0
        %1095 = vmatprep.subr.bf16.mxu0 0
        %1096 = vmatpush1.bf16.msra.mxu0 0
        %1097 = vmatprep.mubr.bf16.mxu0 0
        %1098 = vmatmul.mubr.bf16.gmra.mrb[0].mxu0 %v1063
        %v1099 = vpop.f32.mrb[0].mxu0
        %v1100 = vadd.f32 0.0, %v1099
        %v1101 = vpop.f32.mrb[0].mxu0
        %v1102 = vpop.f32.mrb[0].mxu0
        %v1103 = vadd.f32 0.0, %v1102
        %v1104 = vpop.f32.mrb[0].mxu0
        %1105 = vdwg.mxu0
        %v1106 = vmul.f32 %v828, %v988
        %v1107 = vmul.f32 %v831, %v989
        %v1108 = vmul.f32 %v1055, %v990
        %v1109 = vmul.f32 %v1058, %v991
        %v1110 = vadd.f32 %v1106, %v1108
        %v1111 = vadd.f32 %v1107, %v1109
        %v1112 = vpack.c.bf16 %v1111, %v1110
        %v1113 = vmul.f32 %v901, %v988
        %v1114 = vmul.f32 %v904, %v989
        %v1115 = vmul.f32 %v1100, %v990
        %v1116 = vmul.f32 %v1103, %v991
        %v1117 = vadd.f32 %v1113, %v1115
        %v1118 = vadd.f32 %v1114, %v1116
        %v1119 = vpack.c.bf16 %v1118, %v1117
        %1120 = vst.msk [vmem:[#allocation2] sm:$0xff] %vm711, %v1119
        %v1121 = vpack.c.bf16 %v977, %v974
        %1122 = vst.msk [vmem:[#allocation3] sm:$0xff] %vm711, %v1121
        %v1123 = vlaneseq
        %v1124 = vshrl.u32 %v1123, 7
        %v1125 = vadd.s32 %v1124, 8
        %v1126 = vlaneseq
        %v1127 = vand.u32 %v1126, 127
        %v1128 = vld [vmem:[#allocation2] sm:$0xff]
        %v1129 = vld [vmem:[#allocation3] sm:$0xff]
        %vm1130 = vcmp.ge.s32.totalorder %v1124, %v1127
        %vm1131 = vcmp.ge.s32.totalorder %v1125, %v1127
        %v1132 = vsel %vm1130, 0.0, -1e+30
        %v1133 = vsel %vm1131, 0.0, -1e+30
        %vm1134 = vcmask 261120
        %v1136 = vsel %vm1134, %v1112, 0
        %v1139 = vsel %vm1134, %v1128, 0
        %1141 = vmatprep.subr.bf16.mxu0 0
        %1142 = vmatpush1.bf16.xpose.msra.mxu0 %v1139
        %1143 = vmatprep.subr.bf16.mxu0 0
        %1144 = vmatpush1.bf16.xpose.msra.mxu0 0
        %1145 = vmatprep.subr.bf16.mxu0 0
        %1146 = vmatpush1.bf16.xpose.msra.mxu0 0
        %1147 = vmatprep.subr.bf16.mxu0 0
        %1148 = vmatpush1.bf16.xpose.msra.mxu0 0
        %1149 = vmatprep.subr.bf16.mxu0 0
        %1150 = vmatpush1.bf16.xpose.msra.mxu0 0
        %1151 = vmatprep.subr.bf16.mxu0 0
        %1152 = vmatpush1.bf16.xpose.msra.mxu0 0
        %1153 = vmatprep.subr.bf16.mxu0 0
        %1154 = vmatpush1.bf16.xpose.msra.mxu0 0
        %1155 = vmatprep.subr.bf16.mxu0 0
        %1156 = vmatpush1.bf16.xpose.msra.mxu0 0
        %1157 = vmatprep.subr.bf16.mxu0 0
        %1158 = vmatpush1.bf16.xpose.msra.mxu0 0
        %1159 = vmatprep.subr.bf16.mxu0 0
        %1160 = vmatpush1.bf16.xpose.msra.mxu0 0
        %1161 = vmatprep.subr.bf16.mxu0 0
        %1162 = vmatpush1.bf16.xpose.msra.mxu0 0
        %1163 = vmatprep.subr.bf16.mxu0 0
        %1164 = vmatpush1.bf16.xpose.msra.mxu0 0
        %1165 = vmatprep.subr.bf16.mxu0 0
        %1166 = vmatpush1.bf16.xpose.msra.mxu0 0
        %1167 = vmatprep.subr.bf16.mxu0 0
        %1168 = vmatpush1.bf16.xpose.msra.mxu0 0
        %1169 = vmatprep.subr.bf16.mxu0 0
        %1170 = vmatpush1.bf16.xpose.msra.mxu0 0
        %1171 = vmatprep.subr.bf16.mxu0 0
        %1172 = vmatpush1.bf16.xpose.msra.mxu0 0
        %1173 = vmatprep.mubr.bf16.mxu0 0
        %1174 = vmatmul.mubr.bf16.gmra.mrb[0].mxu0 %v1136
        %v1175 = vpop.f32.mrb[0].mxu0
        %v1176 = vadd.f32 %v1132, %v1175
        %v1177 = vpop.f32.mrb[0].mxu0
        %v1178 = vpop.f32.mrb[0].mxu0
        %v1179 = vadd.f32 %v1133, %v1178
        %v1180 = vpop.f32.mrb[0].mxu0
        %1181 = vdwg.mxu0
        %vm1182 = vcmask 130048
        %v1183 = vsel %vm1182, %v1176, -inf
        %1184 = vmax.xlane.f32.xlu0 %v1183
        %v1185 = vpop.xlane.xlu0 %1184
        %v1186 = vsel %vm1182, %v1179, -inf
        %1187 = vmax.xlane.f32.xlu0 %v1186
        %v1188 = vpop.xlane.xlu0 %1187
        %v1189 = vmax.f32 %v1185, -1e+30
        %v1190 = vmax.f32 %v1188, -1e+30
        %v1191 = vsub.f32 -1e+30, %v1189
        %v1192 = vsub.f32 -1e+30, %v1190
        %v1193 = vmul.f32 %v1191, 1.442695
        %v1194 = vpow.pop %v1193
        %v1195 = vmul.f32 %v1192, 1.442695
        %v1196 = vpow.pop %v1195
        %v1197 = vsub.f32 %v1176, %v1189
        %v1198 = vsub.f32 %v1179, %v1190
        %v1199 = vmul.f32 %v1197, 1.442695
        %v1200 = vpow.pop %v1199
        %v1201 = vmul.f32 %v1198, 1.442695
        %v1202 = vpow.pop %v1201
        %v1203 = vmul.f32 %v1194, 0.0
        %v1204 = vmul.f32 %v1196, 0.0
        %v1205 = vsel %vm1182, %v1200, 0.0
        %1206 = vadd.xlane.f32.xlu0 %v1205
        %v1207 = vpop.xlane.xlu0 %1206
        %v1208 = vsel %vm1182, %v1202, 0.0
        %1209 = vadd.xlane.f32.xlu0 %v1208
        %v1210 = vpop.xlane.xlu0 %1209
        %v1211 = vadd.f32 %v1203, %v1207
        %v1212 = vadd.f32 %v1204, %v1210
        %v1213 = vpack.c.bf16 %v1202, %v1200
        %v1215 = vsel %vm1182, %v1213, 0
        %1217 = vmatprep.subr.bf16.mxu0 0
        %1218 = vmatpush1.bf16.msra.mxu0 %v1129
        %1219 = vmatprep.subr.bf16.mxu0 0
        %1220 = vmatpush1.bf16.msra.mxu0 0
        %1221 = vmatprep.subr.bf16.mxu0 0
        %1222 = vmatpush1.bf16.msra.mxu0 0
        %1223 = vmatprep.subr.bf16.mxu0 0
        %1224 = vmatpush1.bf16.msra.mxu0 0
        %1225 = vmatprep.subr.bf16.mxu0 0
        %1226 = vmatpush1.bf16.msra.mxu0 0
        %1227 = vmatprep.subr.bf16.mxu0 0
        %1228 = vmatpush1.bf16.msra.mxu0 0
        %1229 = vmatprep.subr.bf16.mxu0 0
        %1230 = vmatpush1.bf16.msra.mxu0 0
        %1231 = vmatprep.subr.bf16.mxu0 0
        %1232 = vmatpush1.bf16.msra.mxu0 0
        %1233 = vmatprep.subr.bf16.mxu0 0
        %1234 = vmatpush1.bf16.msra.mxu0 0
        %1235 = vmatprep.subr.bf16.mxu0 0
        %1236 = vmatpush1.bf16.msra.mxu0 0
        %1237 = vmatprep.subr.bf16.mxu0 0
        %1238 = vmatpush1.bf16.msra.mxu0 0
        %1239 = vmatprep.subr.bf16.mxu0 0
        %1240 = vmatpush1.bf16.msra.mxu0 0
        %1241 = vmatprep.subr.bf16.mxu0 0
        %1242 = vmatpush1.bf16.msra.mxu0 0
        %1243 = vmatprep.subr.bf16.mxu0 0
        %1244 = vmatpush1.bf16.msra.mxu0 0
        %1245 = vmatprep.subr.bf16.mxu0 0
        %1246 = vmatpush1.bf16.msra.mxu0 0
        %1247 = vmatprep.subr.bf16.mxu0 0
        %1248 = vmatpush1.bf16.msra.mxu0 0
        %1249 = vmatprep.mubr.bf16.mxu0 0
        %1250 = vmatmul.mubr.bf16.gmra.mrb[0].mxu0 %v1215
        %v1251 = vpop.f32.mrb[0].mxu0
        %v1252 = vadd.f32 0.0, %v1251
        %v1253 = vpop.f32.mrb[0].mxu0
        %v1254 = vpop.f32.mrb[0].mxu0
        %v1255 = vadd.f32 0.0, %v1254
        %v1256 = vpop.f32.mrb[0].mxu0
        %1257 = vdwg.mxu0
        %v1258 = vadd.f32 %v1203, %v1252
        %v1259 = vadd.f32 %v1204, %v1255
        %v1260 = vrcp.pop %v1211
        %v1261 = vrcp.pop %v1212
        %v1262 = vmul.f32 %v1258, %v1260
        %v1263 = vmul.f32 %v1259, %v1261
        %v1264 = vpack.c.bf16 %v1263, %v1262
        %1265 = vst.msk [vmem:[#allocation4] sm:$0xff] %vm1134, %v1264
        %v1266 = vld [vmem:[#allocation2] sm:$0xff]
        %v1267 = vld [vmem:[#allocation3] sm:$0xff]
        %1269 = vrot.lane.b32.xlu0 %v1112, 96
        %v1270 = vpop.permute.xlu0 %1269
        %1272 = vrot.lane.b32.xlu0 %v1266, 96
        %v1273 = vpop.permute.xlu0 %1272
        %v1275 = vsel %vm1134, %v1270, 0
        %v1278 = vsel %vm1134, %v1273, 0
        %1280 = vmatprep.subr.bf16.mxu0 0
        %1281 = vmatpush1.bf16.xpose.msra.mxu0 %v1278
        %1282 = vmatprep.subr.bf16.mxu0 0
        %1283 = vmatpush1.bf16.xpose.msra.mxu0 0
        %1284 = vmatprep.subr.bf16.mxu0 0
        %1285 = vmatpush1.bf16.xpose.msra.mxu0 0
        %1286 = vmatprep.subr.bf16.mxu0 0
        %1287 = vmatpush1.bf16.xpose.msra.mxu0 0
        %1288 = vmatprep.subr.bf16.mxu0 0
        %1289 = vmatpush1.bf16.xpose.msra.mxu0 0
        %1290 = vmatprep.subr.bf16.mxu0 0
        %1291 = vmatpush1.bf16.xpose.msra.mxu0 0
        %1292 = vmatprep.subr.bf16.mxu0 0
        %1293 = vmatpush1.bf16.xpose.msra.mxu0 0
        %1294 = vmatprep.subr.bf16.mxu0 0
        %1295 = vmatpush1.bf16.xpose.msra.mxu0 0
        %1296 = vmatprep.subr.bf16.mxu0 0
        %1297 = vmatpush1.bf16.xpose.msra.mxu0 0
        %1298 = vmatprep.subr.bf16.mxu0 0
        %1299 = vmatpush1.bf16.xpose.msra.mxu0 0
        %1300 = vmatprep.subr.bf16.mxu0 0
        %1301 = vmatpush1.bf16.xpose.msra.mxu0 0
        %1302 = vmatprep.subr.bf16.mxu0 0
        %1303 = vmatpush1.bf16.xpose.msra.mxu0 0
        %1304 = vmatprep.subr.bf16.mxu0 0
        %1305 = vmatpush1.bf16.xpose.msra.mxu0 0
        %1306 = vmatprep.subr.bf16.mxu0 0
        %1307 = vmatpush1.bf16.xpose.msra.mxu0 0
        %1308 = vmatprep.subr.bf16.mxu0 0
        %1309 = vmatpush1.bf16.xpose.msra.mxu0 0
        %1310 = vmatprep.subr.bf16.mxu0 0
        %1311 = vmatpush1.bf16.xpose.msra.mxu0 0
        %1312 = vmatprep.mubr.bf16.mxu0 0
        %1313 = vmatmul.mubr.bf16.gmra.mrb[0].mxu0 %v1275
        %v1314 = vpop.f32.mrb[0].mxu0
        %v1315 = vadd.f32 %v1132, %v1314
        %v1316 = vpop.f32.mrb[0].mxu0
        %v1317 = vpop.f32.mrb[0].mxu0
        %v1318 = vadd.f32 %v1133, %v1317
        %v1319 = vpop.f32.mrb[0].mxu0
        %1320 = vdwg.mxu0
        %v1321 = vsel %vm1182, %v1315, -inf
        %1322 = vmax.xlane.f32.xlu0 %v1321
        %v1323 = vpop.xlane.xlu0 %1322
        %v1324 = vsel %vm1182, %v1318, -inf
        %1325 = vmax.xlane.f32.xlu0 %v1324
        %v1326 = vpop.xlane.xlu0 %1325
        %v1327 = vmax.f32 %v1323, -1e+30
        %v1328 = vmax.f32 %v1326, -1e+30
        %v1329 = vsub.f32 -1e+30, %v1327
        %v1330 = vsub.f32 -1e+30, %v1328
        %v1331 = vmul.f32 %v1329, 1.442695
        %v1332 = vpow.pop %v1331
        %v1333 = vmul.f32 %v1330, 1.442695
        %v1334 = vpow.pop %v1333
        %v1335 = vsub.f32 %v1315, %v1327
        %v1336 = vsub.f32 %v1318, %v1328
        %v1337 = vmul.f32 %v1335, 1.442695
        %v1338 = vpow.pop %v1337
        %v1339 = vmul.f32 %v1336, 1.442695
        %v1340 = vpow.pop %v1339
        %v1341 = vmul.f32 %v1332, 0.0
        %v1342 = vmul.f32 %v1334, 0.0
        %v1343 = vsel %vm1182, %v1338, 0.0
        %1344 = vadd.xlane.f32.xlu0 %v1343
        %v1345 = vpop.xlane.xlu0 %1344
        %v1346 = vsel %vm1182, %v1340, 0.0
        %1347 = vadd.xlane.f32.xlu0 %v1346
        %v1348 = vpop.xlane.xlu0 %1347
        %v1349 = vadd.f32 %v1341, %v1345
        %v1350 = vadd.f32 %v1342, %v1348
        %v1351 = vpack.c.bf16 %v1340, %v1338
        %1353 = vrot.lane.b32.xlu0 %v1267, 96
        %v1354 = vpop.permute.xlu0 %1353
        %v1357 = vsel %vm1182, %v1351, 0
        %1359 = vmatprep.subr.bf16.mxu0 0
        %1360 = vmatpush1.bf16.msra.mxu0 %v1354
        %1361 = vmatprep.subr.bf16.mxu0 0
        %1362 = vmatpush1.bf16.msra.mxu0 0
        %1363 = vmatprep.subr.bf16.mxu0 0
        %1364 = vmatpush1.bf16.msra.mxu0 0
        %1365 = vmatprep.subr.bf16.mxu0 0
        %1366 = vmatpush1.bf16.msra.mxu0 0
        %1367 = vmatprep.subr.bf16.mxu0 0
        %1368 = vmatpush1.bf16.msra.mxu0 0
        %1369 = vmatprep.subr.bf16.mxu0 0
        %1370 = vmatpush1.bf16.msra.mxu0 0
        %1371 = vmatprep.subr.bf16.mxu0 0
        %1372 = vmatpush1.bf16.msra.mxu0 0
        %1373 = vmatprep.subr.bf16.mxu0 0
        %1374 = vmatpush1.bf16.msra.mxu0 0
        %1375 = vmatprep.subr.bf16.mxu0 0
        %1376 = vmatpush1.bf16.msra.mxu0 0
        %1377 = vmatprep.subr.bf16.mxu0 0
        %1378 = vmatpush1.bf16.msra.mxu0 0
        %1379 = vmatprep.subr.bf16.mxu0 0
        %1380 = vmatpush1.bf16.msra.mxu0 0
        %1381 = vmatprep.subr.bf16.mxu0 0
        %1382 = vmatpush1.bf16.msra.mxu0 0
        %1383 = vmatprep.subr.bf16.mxu0 0
        %1384 = vmatpush1.bf16.msra.mxu0 0
        %1385 = vmatprep.subr.bf16.mxu0 0
        %1386 = vmatpush1.bf16.msra.mxu0 0
        %1387 = vmatprep.subr.bf16.mxu0 0
        %1388 = vmatpush1.bf16.msra.mxu0 0
        %1389 = vmatprep.subr.bf16.mxu0 0
        %1390 = vmatpush1.bf16.msra.mxu0 0
        %1391 = vmatprep.mubr.bf16.mxu0 0
        %1392 = vmatmul.mubr.bf16.gmra.mrb[0].mxu0 %v1357
        %v1393 = vpop.f32.mrb[0].mxu0
        %v1394 = vadd.f32 0.0, %v1393
        %v1395 = vpop.f32.mrb[0].mxu0
        %v1396 = vpop.f32.mrb[0].mxu0
        %v1397 = vadd.f32 0.0, %v1396
        %v1398 = vpop.f32.mrb[0].mxu0
        %1399 = vdwg.mxu0
        %v1400 = vadd.f32 %v1341, %v1394
        %v1401 = vadd.f32 %v1342, %v1397
        %v1402 = vrcp.pop %v1349
        %v1403 = vrcp.pop %v1350
        %v1404 = vmul.f32 %v1400, %v1402
        %v1405 = vmul.f32 %v1401, %v1403
        %v1406 = vpack.c.bf16 %v1405, %v1404
        %1408 = vrot.lane.b32.xlu0 %v1406, 32
        %v1409 = vpop.permute.xlu0 %1408
        %vm1411 = vcmask 523520
        %1412 = vst.msk [vmem:[#allocation4] sm:$0xff] %vm1411, %v1409
        %v1413 = vld [vmem:[#allocation4] sm:$0xff]
        %v1414 = vld [vmem:[#allocation16] sm:$0xf]
        %v1415 = vld [vmem:[#allocation16 + $0x4] sm:$0xf]
        %v1416 = vld [vmem:[#allocation16 + $0x8] sm:$0xf]
        %v1417 = vld [vmem:[#allocation16 + $0xc] sm:$0xf]
        %v1418 = vld [vmem:[#allocation16 + $0x10] sm:$0xf]
        %v1419 = vld [vmem:[#allocation16 + $0x14] sm:$0xf]
        %v1420 = vld [vmem:[#allocation16 + $0x18] sm:$0xf]
        %v1421 = vld [vmem:[#allocation16 + $0x1c] sm:$0xf]
        %v1430 = vunpack.c.l.b16 %v1414
        %v1431 = vunpack.c.l.b16 %v1415
        %v1432 = vunpack.c.l.b16 %v1416
        %v1433 = vunpack.c.l.b16 %v1417
        %v1434 = vunpack.c.l.b16 %v1418
        %v1435 = vunpack.c.l.b16 %v1419
        %v1436 = vunpack.c.l.b16 %v1420
        %v1437 = vunpack.c.l.b16 %v1421
        %v1438 = vpack.c.b16 %v1431, %v1430
        %v1439 = vpack.c.b16 %v1433, %v1432
        %v1440 = vpack.c.b16 %v1435, %v1434
        %v1441 = vpack.c.b16 %v1437, %v1436
        %v1447 = vsel %vm711, %v1413, 0
        %1449 = vmatprep.subr.bf16.mxu0 0
        %1450 = vmatpush1.bf16.msra.mxu0 %v1438
        %1451 = vmatprep.subr.bf16.mxu0 0
        %1452 = vmatpush1.bf16.msra.mxu0 %v1439
        %1453 = vmatprep.subr.bf16.mxu0 0
        %1454 = vmatpush1.bf16.msra.mxu0 %v1440
        %1455 = vmatprep.subr.bf16.mxu0 0
        %1456 = vmatpush1.bf16.msra.mxu0 %v1441
        %1457 = vmatprep.subr.bf16.mxu0 0
        %1458 = vmatpush1.bf16.msra.mxu0 0
        %1459 = vmatprep.subr.bf16.mxu0 0
        %1460 = vmatpush1.bf16.msra.mxu0 0
        %1461 = vmatprep.subr.bf16.mxu0 0
        %1462 = vmatpush1.bf16.msra.mxu0 0
        %1463 = vmatprep.subr.bf16.mxu0 0
        %1464 = vmatpush1.bf16.msra.mxu0 0
        %1465 = vmatprep.subr.bf16.mxu0 0
        %1466 = vmatpush1.bf16.msra.mxu0 0
        %1467 = vmatprep.subr.bf16.mxu0 0
        %1468 = vmatpush1.bf16.msra.mxu0 0
        %1469 = vmatprep.subr.bf16.mxu0 0
        %1470 = vmatpush1.bf16.msra.mxu0 0
        %1471 = vmatprep.subr.bf16.mxu0 0
        %1472 = vmatpush1.bf16.msra.mxu0 0
        %1473 = vmatprep.subr.bf16.mxu0 0
        %1474 = vmatpush1.bf16.msra.mxu0 0
        %1475 = vmatprep.subr.bf16.mxu0 0
        %1476 = vmatpush1.bf16.msra.mxu0 0
        %1477 = vmatprep.subr.bf16.mxu0 0
        %1478 = vmatpush1.bf16.msra.mxu0 0
        %1479 = vmatprep.subr.bf16.mxu0 0
        %1480 = vmatpush1.bf16.msra.mxu0 0
        %1481 = vmatprep.mubr.bf16.mxu0 0
        %1482 = vmatmul.mubr.bf16.gmra.mrb[0].mxu0 %v1447
        %v1483 = vpop.f32.mrb[0].mxu0
        %v1484 = vadd.f32 0.0, %v1483
        %v1485 = vpop.f32.mrb[0].mxu0
        %v1486 = vpop.f32.mrb[0].mxu0
        %v1487 = vadd.f32 0.0, %v1486
        %v1488 = vpop.f32.mrb[0].mxu0
        %1489 = vdwg.mxu0
        %v1490 = vadd.f32 %v709, %v1484
        %v1491 = vadd.f32 %v710, %v1487
        %v1492 = vld [vmem:[#allocation22] sm:$0x1]
        %v1493 = vld [vmem:[#allocation23] sm:$0x1]
        %v1494 = vld [vmem:[#allocation25] sm:$0xf]
        %v1495 = vld [vmem:[#allocation25 + $0x4] sm:$0xf]
        %v1496 = vld [vmem:[#allocation25 + $0x8] sm:$0xf]
        %v1497 = vld [vmem:[#allocation25 + $0xc] sm:$0xf]
        %v1498 = vld [vmem:[#allocation25 + $0x10] sm:$0xf]
        %v1499 = vld [vmem:[#allocation25 + $0x14] sm:$0xf]
        %v1500 = vld [vmem:[#allocation25 + $0x18] sm:$0xf]
        %v1501 = vld [vmem:[#allocation25 + $0x1c] sm:$0xf]
        %v1502 = vld [vmem:[#allocation26] sm:$0xf]
        %v1503 = vld [vmem:[#allocation26 + $0x4] sm:$0xf]
        %v1504 = vld [vmem:[#allocation26 + $0x8] sm:$0xf]
        %v1505 = vld [vmem:[#allocation26 + $0xc] sm:$0xf]
        %v1506 = vld [vmem:[#allocation26 + $0x10] sm:$0xf]
        %v1507 = vld [vmem:[#allocation26 + $0x14] sm:$0xf]
        %v1508 = vld [vmem:[#allocation26 + $0x18] sm:$0xf]
        %v1509 = vld [vmem:[#allocation26 + $0x1c] sm:$0xf]
        %v1510 = vld [vmem:[#allocation28] sm:$0xf]
        %v1511 = vld [vmem:[#allocation28 + $0x4] sm:$0xf]
        %v1512 = vld [vmem:[#allocation28 + $0x8] sm:$0xf]
        %v1513 = vld [vmem:[#allocation28 + $0xc] sm:$0xf]
        %v1514 = vld [vmem:[#allocation28 + $0x10] sm:$0xf]
        %v1515 = vld [vmem:[#allocation28 + $0x14] sm:$0xf]
        %v1516 = vld [vmem:[#allocation28 + $0x18] sm:$0xf]
        %v1517 = vld [vmem:[#allocation28 + $0x1c] sm:$0xf]
        %v1518 = vld [vmem:[#allocation28 + $0x20] sm:$0xf]
        %v1519 = vld [vmem:[#allocation28 + $0x24] sm:$0xf]
        %v1520 = vld [vmem:[#allocation28 + $0x28] sm:$0xf]
        %v1521 = vld [vmem:[#allocation28 + $0x2c] sm:$0xf]
        %v1522 = vld [vmem:[#allocation28 + $0x30] sm:$0xf]
        %v1523 = vld [vmem:[#allocation28 + $0x34] sm:$0xf]
        %v1524 = vld [vmem:[#allocation28 + $0x38] sm:$0xf]
        %v1525 = vld [vmem:[#allocation28 + $0x3c] sm:$0xf]
        %v1526 = vsel %vm711, %v1490, 0.0
        %1527 = vadd.xlane.f32.xlu0 %v1526
        %v1528 = vpop.xlane.xlu0 %1527
        %v1529 = vsel %vm711, %v1491, 0.0
        %1530 = vadd.xlane.f32.xlu0 %v1529
        %v1531 = vpop.xlane.xlu0 %1530
        %v1532 = vmul.f32 %v1528, %v718
        %v1533 = vmul.f32 %v1531, %v718
        %v1534 = vsub.f32 %v1490, %v1532
        %v1535 = vsub.f32 %v1491, %v1533
        %v1536 = vmul.f32 %v1534, %v1534
        %v1537 = vmul.f32 %v1535, %v1535
        %v1538 = vsel %vm711, %v1536, 0.0
        %1539 = vadd.xlane.f32.xlu0 %v1538
        %v1540 = vpop.xlane.xlu0 %1539
        %v1541 = vsel %vm711, %v1537, 0.0
        %1542 = vadd.xlane.f32.xlu0 %v1541
        %v1543 = vpop.xlane.xlu0 %1542
        %v1544 = vmul.f32 %v1540, %v718
        %v1545 = vmul.f32 %v1543, %v718
        %v1546 = vadd.f32 %v1544, 1e-05
        %v1547 = vadd.f32 %v1545, 1e-05
        %v1548 = vrsqrt.pop %v1546
        %v1549 = vrsqrt.pop %v1547
        %v1550 = vmul.f32 %v1534, %v1548
        %v1551 = vmul.f32 %v1535, %v1549
        %v1553 = vlaneseq
        %v1554 = vshrl.u32 %v1553, 7
        %v1555 = vsub.s32 0, %v1554
        %v1556 = vrot.slane %v1492, %v1555
        %v1558 = vmul.f32 %v1550, %v1556
        %v1559 = vmul.f32 %v1551, %v1556
        %v1561 = vlaneseq
        %v1562 = vshrl.u32 %v1561, 7
        %v1563 = vsub.s32 0, %v1562
        %v1564 = vrot.slane %v1493, %v1563
        %v1566 = vadd.f32 %v1558, %v1564
        %v1567 = vadd.f32 %v1559, %v1564
        %v1568 = vpack.c.bf16 %v1567, %v1566
        %v1577 = vunpack.c.l.b16 %v1494
        %v1578 = vunpack.c.l.b16 %v1495
        %v1579 = vunpack.c.l.b16 %v1496
        %v1580 = vunpack.c.l.b16 %v1497
        %v1581 = vunpack.c.l.b16 %v1498
        %v1582 = vunpack.c.l.b16 %v1499
        %v1583 = vunpack.c.l.b16 %v1500
        %v1584 = vunpack.c.l.b16 %v1501
        %v1585 = vpack.c.b16 %v1578, %v1577
        %v1586 = vpack.c.b16 %v1580, %v1579
        %v1587 = vpack.c.b16 %v1582, %v1581
        %v1588 = vpack.c.b16 %v1584, %v1583
        %v1594 = vsel %vm711, %v1568, 0
        %1596 = vmatprep.subr.bf16.mxu0 0
        %1597 = vmatpush1.bf16.msra.mxu0 %v1585
        %1598 = vmatprep.subr.bf16.mxu0 0
        %1599 = vmatpush1.bf16.msra.mxu0 %v1586
        %1600 = vmatprep.subr.bf16.mxu0 0
        %1601 = vmatpush1.bf16.msra.mxu0 %v1587
        %1602 = vmatprep.subr.bf16.mxu0 0
        %1603 = vmatpush1.bf16.msra.mxu0 %v1588
        %1604 = vmatprep.subr.bf16.mxu0 0
        %1605 = vmatpush1.bf16.msra.mxu0 0
        %1606 = vmatprep.subr.bf16.mxu0 0
        %1607 = vmatpush1.bf16.msra.mxu0 0
        %1608 = vmatprep.subr.bf16.mxu0 0
        %1609 = vmatpush1.bf16.msra.mxu0 0
        %1610 = vmatprep.subr.bf16.mxu0 0
        %1611 = vmatpush1.bf16.msra.mxu0 0
        %1612 = vmatprep.subr.bf16.mxu0 0
        %1613 = vmatpush1.bf16.msra.mxu0 0
        %1614 = vmatprep.subr.bf16.mxu0 0
        %1615 = vmatpush1.bf16.msra.mxu0 0
        %1616 = vmatprep.subr.bf16.mxu0 0
        %1617 = vmatpush1.bf16.msra.mxu0 0
        %1618 = vmatprep.subr.bf16.mxu0 0
        %1619 = vmatpush1.bf16.msra.mxu0 0
        %1620 = vmatprep.subr.bf16.mxu0 0
        %1621 = vmatpush1.bf16.msra.mxu0 0
        %1622 = vmatprep.subr.bf16.mxu0 0
        %1623 = vmatpush1.bf16.msra.mxu0 0
        %1624 = vmatprep.subr.bf16.mxu0 0
        %1625 = vmatpush1.bf16.msra.mxu0 0
        %1626 = vmatprep.subr.bf16.mxu0 0
        %1627 = vmatpush1.bf16.msra.mxu0 0
        %1628 = vmatprep.mubr.bf16.mxu0 0
        %1629 = vmatmul.mubr.bf16.gmra.mrb[0].mxu0 %v1594
        %v1630 = vpop.f32.mrb[0].mxu0
        %v1631 = vadd.f32 0.0, %v1630
        %v1632 = vpop.f32.mrb[0].mxu0
        %v1633 = vpop.f32.mrb[0].mxu0
        %v1634 = vadd.f32 0.0, %v1633
        %v1635 = vpop.f32.mrb[0].mxu0
        %1636 = vdwg.mxu0
        %v1645 = vunpack.c.l.b16 %v1502
        %v1646 = vunpack.c.l.b16 %v1503
        %v1647 = vunpack.c.l.b16 %v1504
        %v1648 = vunpack.c.l.b16 %v1505
        %v1649 = vunpack.c.l.b16 %v1506
        %v1650 = vunpack.c.l.b16 %v1507
        %v1651 = vunpack.c.l.b16 %v1508
        %v1652 = vunpack.c.l.b16 %v1509
        %v1653 = vpack.c.b16 %v1646, %v1645
        %v1654 = vpack.c.b16 %v1648, %v1647
        %v1655 = vpack.c.b16 %v1650, %v1649
        %v1656 = vpack.c.b16 %v1652, %v1651
        %1661 = vmatprep.subr.bf16.mxu0 0
        %1662 = vmatpush1.bf16.msra.mxu0 %v1653
        %1663 = vmatprep.subr.bf16.mxu0 0
        %1664 = vmatpush1.bf16.msra.mxu0 %v1654
        %1665 = vmatprep.subr.bf16.mxu0 0
        %1666 = vmatpush1.bf16.msra.mxu0 %v1655
        %1667 = vmatprep.subr.bf16.mxu0 0
        %1668 = vmatpush1.bf16.msra.mxu0 %v1656
        %1669 = vmatprep.subr.bf16.mxu0 0
        %1670 = vmatpush1.bf16.msra.mxu0 0
        %1671 = vmatprep.subr.bf16.mxu0 0
        %1672 = vmatpush1.bf16.msra.mxu0 0
        %1673 = vmatprep.subr.bf16.mxu0 0
        %1674 = vmatpush1.bf16.msra.mxu0 0
        %1675 = vmatprep.subr.bf16.mxu0 0
        %1676 = vmatpush1.bf16.msra.mxu0 0
        %1677 = vmatprep.subr.bf16.mxu0 0
        %1678 = vmatpush1.bf16.msra.mxu0 0
        %1679 = vmatprep.subr.bf16.mxu0 0
        %1680 = vmatpush1.bf16.msra.mxu0 0
        %1681 = vmatprep.subr.bf16.mxu0 0
        %1682 = vmatpush1.bf16.msra.mxu0 0
        %1683 = vmatprep.subr.bf16.mxu0 0
        %1684 = vmatpush1.bf16.msra.mxu0 0
        %1685 = vmatprep.subr.bf16.mxu0 0
        %1686 = vmatpush1.bf16.msra.mxu0 0
        %1687 = vmatprep.subr.bf16.mxu0 0
        %1688 = vmatpush1.bf16.msra.mxu0 0
        %1689 = vmatprep.subr.bf16.mxu0 0
        %1690 = vmatpush1.bf16.msra.mxu0 0
        %1691 = vmatprep.subr.bf16.mxu0 0
        %1692 = vmatpush1.bf16.msra.mxu0 0
        %1693 = vmatprep.mubr.bf16.mxu0 0
        %1694 = vmatmul.mubr.bf16.gmra.mrb[0].mxu0 %v1594
        %v1695 = vpop.f32.mrb[0].mxu0
        %v1696 = vadd.f32 0.0, %v1695
        %v1697 = vpop.f32.mrb[0].mxu0
        %v1698 = vpop.f32.mrb[0].mxu0
        %v1699 = vadd.f32 0.0, %v1698
        %v1700 = vpop.f32.mrb[0].mxu0
        %1701 = vdwg.mxu0
        %v1702 = vxor.u32 %v1696, 2147483648
        %v1703 = vxor.u32 %v1699, 2147483648
        %v1704 = vmul.f32 %v1702, 1.442695
        %v1705 = vpow.pop %v1704
        %v1706 = vmul.f32 %v1703, 1.442695
        %v1707 = vpow.pop %v1706
        %v1708 = vadd.f32 %v1705, 1.0
        %v1709 = vadd.f32 %v1707, 1.0
        %v1710 = vrcp.pop %v1708
        %v1711 = vmul.f32 1.0, %v1710
        %v1712 = vrcp.pop %v1709
        %v1713 = vmul.f32 1.0, %v1712
        %v1714 = vmul.f32 %v1696, %v1711
        %v1715 = vmul.f32 %v1699, %v1713
        %v1716 = vmul.f32 %v1631, %v1714
        %v1717 = vmul.f32 %v1634, %v1715
        %v1718 = vpack.c.bf16 %v1717, %v1716
        %v1735 = vunpack.c.l.b16 %v1510
        %v1736 = vunpack.c.l.b16 %v1511
        %v1737 = vunpack.c.l.b16 %v1512
        %v1738 = vunpack.c.l.b16 %v1513
        %v1739 = vunpack.c.l.b16 %v1514
        %v1740 = vunpack.c.l.b16 %v1515
        %v1741 = vunpack.c.l.b16 %v1516
        %v1742 = vunpack.c.l.b16 %v1517
        %v1743 = vunpack.c.l.b16 %v1518
        %v1744 = vunpack.c.l.b16 %v1519
        %v1745 = vunpack.c.l.b16 %v1520
        %v1746 = vunpack.c.l.b16 %v1521
        %v1747 = vunpack.c.l.b16 %v1522
        %v1748 = vunpack.c.l.b16 %v1523
        %v1749 = vunpack.c.l.b16 %v1524
        %v1750 = vunpack.c.l.b16 %v1525
        %v1751 = vpack.c.b16 %v1736, %v1735
        %v1752 = vpack.c.b16 %v1738, %v1737
        %v1753 = vpack.c.b16 %v1740, %v1739
        %v1754 = vpack.c.b16 %v1742, %v1741
        %v1755 = vpack.c.b16 %v1744, %v1743
        %v1756 = vpack.c.b16 %v1746, %v1745
        %v1757 = vpack.c.b16 %v1748, %v1747
        %v1758 = vpack.c.b16 %v1750, %v1749
        %1767 = vmatprep.subr.bf16.mxu0 0
        %1768 = vmatpush1.bf16.msra.mxu0 %v1751
        %1769 = vmatprep.subr.bf16.mxu0 0
        %1770 = vmatpush1.bf16.msra.mxu0 %v1752
        %1771 = vmatprep.subr.bf16.mxu0 0
        %1772 = vmatpush1.bf16.msra.mxu0 %v1753
        %1773 = vmatprep.subr.bf16.mxu0 0
        %1774 = vmatpush1.bf16.msra.mxu0 %v1754
        %1775 = vmatprep.subr.bf16.mxu0 0
        %1776 = vmatpush1.bf16.msra.mxu0 %v1755
        %1777 = vmatprep.subr.bf16.mxu0 0
        %1778 = vmatpush1.bf16.msra.mxu0 %v1756
        %1779 = vmatprep.subr.bf16.mxu0 0
        %1780 = vmatpush1.bf16.msra.mxu0 %v1757
        %1781 = vmatprep.subr.bf16.mxu0 0
        %1782 = vmatpush1.bf16.msra.mxu0 %v1758
        %1783 = vmatprep.subr.bf16.mxu0 0
        %1784 = vmatpush1.bf16.msra.mxu0 0
        %1785 = vmatprep.subr.bf16.mxu0 0
        %1786 = vmatpush1.bf16.msra.mxu0 0
        %1787 = vmatprep.subr.bf16.mxu0 0
        %1788 = vmatpush1.bf16.msra.mxu0 0
        %1789 = vmatprep.subr.bf16.mxu0 0
        %1790 = vmatpush1.bf16.msra.mxu0 0
        %1791 = vmatprep.subr.bf16.mxu0 0
        %1792 = vmatpush1.bf16.msra.mxu0 0
        %1793 = vmatprep.subr.bf16.mxu0 0
        %1794 = vmatpush1.bf16.msra.mxu0 0
        %1795 = vmatprep.subr.bf16.mxu0 0
        %1796 = vmatpush1.bf16.msra.mxu0 0
        %1797 = vmatprep.subr.bf16.mxu0 0
        %1798 = vmatpush1.bf16.msra.mxu0 0
        %1799 = vmatprep.mubr.bf16.mxu0 0
        %1800 = vmatmul.mubr.bf16.gmra.mrb[0].mxu0 %v1718
        %v1801 = vpop.f32.mrb[0].mxu0
        %v1802 = vadd.f32 0.0, %v1801
        %v1803 = vpop.f32.mrb[0].mxu0
        %v1804 = vpop.f32.mrb[0].mxu0
        %v1805 = vadd.f32 0.0, %v1804
        %v1806 = vpop.f32.mrb[0].mxu0
        %1807 = vdwg.mxu0
        %v1808 = vadd.f32 %v1490, %v1802
        %v1809 = vadd.f32 %v1491, %v1805
        %1810 = vst.msk [vmem:[%s707] sm:$0xff] %vm711, %v1808
        %1811 = vst.msk [vmem:[%s707 + $0x8] sm:$0xff] %vm711, %v1809
        %s1812 = sand.u32 %s367, 1
        %s1813 = scalar_lea.sflag [#allocation7], %s1812
        %s1814 = sand.u32 %s367, 1
        %s1815 = smul.addr %s1814, 16
        %s1816 = scalar_lea.vmem [#allocation29], %s1815
        // Predicated region
        $region141: #{tpu_custom_call.1} parent=79 // pred_check
          %p1817 = pneg %p377
        $region142: #{tpu_custom_call.1} parent=79 // pred_check_branch
          %1819 = sbr.rel (%p1817) target = $region144
        $region143: #{tpu_custom_call.1} parent=79 // pred_region
          %s1821 = ssub.s32 256, 256
          %1822 = vsyncadd %s1813, %s1821
          %s1823 = smul.addr %s39, 2
          %s1824 = smul.addr %s1823, 128
          %s1825 = scalar_lea.hbm %s15, %s1824
          %s1826 = sshll.u32 %s1816, 4
          %s1827 = int_to_ptr.vmem [resolvable:$true] %s1826
          %1832 = dma.vmem_to_hbm [thread:$0]  %s1827, 256, %s1825, %s1813, 128, 128, 8
        $region144: #{tpu_custom_call.1} parent=79 // pred_fallthru
          _
      $region80: #{tpu_custom_call.1} parent=5 // pred_fallthru
        _
      %p1833 = scmp.le.s32.totalorder 2, %s34
      // Predicated region
      $region145: #{tpu_custom_call.1} parent=5 // pred_check
        %p1834 = pneg %p1833
      $region146: #{tpu_custom_call.1} parent=5 // pred_check_branch
        %1836 = sbr.rel (%p1834) target = $region148
      $region147: #{tpu_custom_call.1} parent=5 // pred_region
        %s1837 = ssub.s32 %s34, 2
        // Predicated region
        $region149: #{tpu_custom_call.1} parent=147 // pred_check
          %p1838 = pneg %p383
        $region150: #{tpu_custom_call.1} parent=147 // pred_check_branch
          %1840 = sbr.rel (%p1838) target = $region152
        $region151: #{tpu_custom_call.1} parent=147 // pred_region
          %s1841 = sand.u32 %s368, 1
          %s1842 = scalar_lea.sflag [#allocation7], %s1841
          %s1843 = sand.u32 %s368, 1
          %s1844 = smul.addr %s1843, 16
          %s1845 = scalar_lea.vmem [#allocation29], %s1844
          %1846 = dma.done %s1842, 256
        $region152: #{tpu_custom_call.1} parent=147 // pred_fallthru
          _
      $region148: #{tpu_custom_call.1} parent=5 // pred_fallthru
        _
    $region6: #{tpu_custom_call.1} parent=1 // loop_footer
      %s38 = sadd.s32 1, %s34
    $region7: #{tpu_custom_call.1} parent=1 // loop_footer_branch
      %33 = sbr.rel target = $region3
    $region8: #{tpu_custom_call.1} parent=1 // loop_exit
      _
    %1847 = vsyncpa [#allocation6], 1
    %s1848 = scalar_lea.sflag [#allocation6], 1
    %1849 = vsyncpa %s1848, 1
    %1850 = vsyncpa [#allocation9], 1
    %1851 = vsyncpa [#allocation12], 1
    %1852 = vsyncpa [#allocation15], 1
    %1853 = vsyncpa [#allocation18], 1
    %1854 = vsyncpa [#allocation21], 1
    %1855 = vsyncpa [#allocation24], 1
    %1856 = vsyncpa [#allocation27], 1
    %1857 = vsyncpa [#allocation7], 1
    %s1858 = scalar_lea.sflag [#allocation7], 1
    %1859 = vsyncpa %s1858, 1

</llo_original>
